<compile_context>
chip_gen: v7x
topology: tpu7x:2x2x1
jax: 0.10.0
libtpu: 0.0.40
codegen_flags: <defaults>
</compile_context>

<pallas_src>
import math
from functools import partial

import jax
import jax.numpy as jnp
from jax.experimental import pallas as pl
from jax.experimental.pallas import tpu as pltpu


# -----------------------------------------------------------------------------
# Kernel 1: per-row "head" — mu / logvar MLPs, pair-kernel operands, positive.
# -----------------------------------------------------------------------------
def _head_kernel(x_ref, y_ref,
                 w1m_ref, b1m_ref, w2m_ref, b2m_ref,
                 w1v_ref, b1v_ref, w2v_ref, b2v_ref,
                 mu_iv_ref, nh_iv_ref, rcq_ref, pos_ref):
    x = x_ref[...]                                               # (TB, x_dim)
    y = y_ref[...]                                               # (TB, y_dim)

    h_mu = jnp.maximum(
        jnp.dot(x, w1m_ref[...], preferred_element_type=jnp.float32)
        + b1m_ref[...], 0.0)
    mu = jnp.dot(h_mu, w2m_ref[...], preferred_element_type=jnp.float32) \
        + b2m_ref[...]                                           # (TB, y_dim)

    h_lv = jnp.maximum(
        jnp.dot(x, w1v_ref[...], preferred_element_type=jnp.float32)
        + b1v_ref[...], 0.0)
    logvar = jnp.tanh(
        jnp.dot(h_lv, w2v_ref[...], preferred_element_type=jnp.float32)
        + b2v_ref[...])                                          # (TB, y_dim)

    iv = jnp.exp(-logvar)                                        # 1 / exp(logvar)
    mu_iv = mu * iv

    # Pair-kernel MXU operands (signs folded so the pair kernel only adds rcq).
    mu_iv_ref[...] = mu_iv                                       # A[:, :D]
    nh_iv_ref[...] = -0.5 * iv                                   # A[:, D:]
    # rcq = -0.5*sum(logvar) - 0.5*sum(mu^2 * iv)  (per-row constant)
    rcq_ref[...] = -0.5 * (jnp.sum(logvar, axis=-1, keepdims=True)
                           + jnp.sum(mu * mu_iv, axis=-1, keepdims=True))
    # positive term, computed in the direct (non-expanded) form.
    pos_ref[...] = jnp.sum(-0.5 * (mu - y) ** 2 * iv - 0.5 * logvar,
                           axis=-1, keepdims=True)


def _head(x, y, params, *, tile_b):
    n, x_dim = x.shape
    _, y_dim = y.shape
    hh = params["w1_mu"].shape[1]
    assert n % tile_b == 0

    full = lambda shape: pl.BlockSpec(shape, lambda r: (0, 0))
    row = lambda c: pl.BlockSpec((tile_b, c), lambda r: (r, 0))

    return pl.pallas_call(
        _head_kernel,
        out_shape=(
            jax.ShapeDtypeStruct((n, y_dim), jnp.float32),   # mu * exp(-logvar)
            jax.ShapeDtypeStruct((n, y_dim), jnp.float32),   # -0.5 * exp(-logvar)
            jax.ShapeDtypeStruct((n, 1), jnp.float32),       # rcq
            jax.ShapeDtypeStruct((n, 1), jnp.float32),       # positive
        ),
        grid_spec=pltpu.PrefetchScalarGridSpec(
            num_scalar_prefetch=0,
            grid=(n // tile_b,),
            in_specs=[
                row(x_dim), row(y_dim),
                full((x_dim, hh)), full((1, hh)), full((hh, y_dim)), full((1, y_dim)),
                full((x_dim, hh)), full((1, hh)), full((hh, y_dim)), full((1, y_dim)),
            ],
            out_specs=[row(y_dim), row(y_dim), row(1), row(1)],
        ),
        compiler_params=pltpu.CompilerParams(dimension_semantics=("parallel",)),
    )(x, y,
      params["w1_mu"], params["b1_mu"], params["w2_mu"], params["b2_mu"],
      params["w1_lv"], params["b1_lv"], params["w2_lv"], params["b2_lv"])
    # TODO(synk): minor head cleanups (fused w1_mu||w1_lv first-layer matmul,
    # packing the two (n,1) scalar streams) skipped — head is O(N*H) and free.


# -----------------------------------------------------------------------------
# Kernel 2: pairwise log-probs via one small-K MXU matmul + fused leave-one-out
# (diag-masked) online logsumexp over the mu index.
# -----------------------------------------------------------------------------
def _pair_kernel(yb_ref, a_ref, rcq_ref, neg_ref, m_sc, s_sc):
    # yb_ref : (2D, TJ)  concat([y, y^2], 1).T column (j) tile; j on the lane axis.
    # a_ref  : (TI, 2D)  concat([mu*iv, -0.5*iv], 1) row (i) tile.
    # rcq_ref: (TI, 1)   per-row constant.
    # neg_ref: (1, TJ)   masked logsumexp over i, written on the last i step.
    # m_sc/s_sc: (1, TJ) online-logsumexp state carried across the i (reduction) axis.
    j = pl.program_id(0)
    i = pl.program_id(1)
    ti = a_ref.shape[0]
    tj = yb_ref.shape[1]

    @pl.when(i == 0)
    def _init():
        m_sc[...] = jnp.full_like(m_sc, -jnp.inf)
        s_sc[...] = jnp.zeros_like(s_sc)

    # all_probs tile: one MXU matmul (K = 2*y_dim) + per-row constant broadcast.
    ap = jnp.dot(a_ref[...], yb_ref[...],
                 preferred_element_type=jnp.float32) + rcq_ref[...]   # (TI, TJ)

    # Online (flash-style) logsumexp update over the mu index (axis 0).
    def _lse_update(ap_val):
        tile_max = jnp.max(ap_val, axis=0, keepdims=True)            # (1, TJ)
        m_new = jnp.maximum(m_sc[...], tile_max)
        s_sc[...] = s_sc[...] * jnp.exp(m_sc[...] - m_new) \
            + jnp.sum(jnp.exp(ap_val - m_new), axis=0, keepdims=True)
        m_sc[...] = m_new

    # Diagonal (-20) mask only when this tile's global [row) x [col) ranges
    # intersect the diagonal; off-diagonal tiles skip the iota/where passes.
    diag_hit = jnp.logical_and(i * ti < (j + 1) * tj, j * tj < (i + 1) * ti)

    @pl.when(diag_hit)
    def _with_mask():
        row = i * ti + jax.lax.broadcasted_iota(jnp.int32, (ti, tj), 0)
        col = j * tj + jax.lax.broadcasted_iota(jnp.int32, (ti, tj), 1)
        _lse_update(ap + jnp.where(row == col, -20.0, 0.0))

    @pl.when(jnp.logical_not(diag_hit))
    def _no_mask():
        _lse_update(ap)

    @pl.when(i == pl.num_programs(1) - 1)
    def _finalize():
        neg_ref[...] = m_sc[...] + jnp.log(s_sc[...])


def _masked_lse(yb_t, a, rcq, *, tile_i, tile_j):
    d2, n = yb_t.shape
    assert n % tile_i == 0 and n % tile_j == 0
    return pl.pallas_call(
        _pair_kernel,
        out_shape=jax.ShapeDtypeStruct((1, n), jnp.float32),
        grid_spec=pltpu.PrefetchScalarGridSpec(
            num_scalar_prefetch=0,
            grid=(n // tile_j, n // tile_i),     # j (parallel) outer, i (reduction) inner
            in_specs=[
                pl.BlockSpec((d2, tile_j), lambda j, i: (0, j)),      # [y; y^2]^T cols
                pl.BlockSpec((tile_i, d2), lambda j, i: (i, 0)),      # [mu*iv, -iv/2]
                pl.BlockSpec((tile_i, 1), lambda j, i: (i, 0)),       # rcq
            ],
            out_specs=pl.BlockSpec((1, tile_j), lambda j, i: (0, j)),
            scratch_shapes=[pltpu.VMEM((1, tile_j), jnp.float32),
                            pltpu.VMEM((1, tile_j), jnp.float32)],
        ),
        compiler_params=pltpu.CompilerParams(
            dimension_semantics=("parallel", "arbitrary"),
            vmem_limit_bytes=32 * 1024 * 1024),
    )(yb_t, a, rcq)


def _pick_tile(n, max_tile, quantum):
    """Largest t <= max_tile with t % quantum == 0 and n % t == 0; falls back to n."""
    if n <= max_tile:
        return n
    t = (max_tile // quantum) * quantum
    while t >= quantum:
        if n % t == 0:
            return t
        t -= quantum
    return n


@partial(jax.jit, static_argnames=("tile_i", "tile_j", "tile_b"))
def l1out_forward(x, y, params, tile_i=None, tile_j=None, tile_b=None):
    """L1OutUB forward: mean(positive - negative); all O(N^2) work in Pallas."""
    n = y.shape[0]
    tile_b = tile_b or _pick_tile(n, 256, 8)
    tile_i = tile_i or _pick_tile(n, 512, 8)
    if tile_j is None:
        # Cap so there are >= 2 lane-aligned "parallel" j tiles whenever possible
        # (v7x has 2 TensorCores/chip); fall back to the full N for small N.
        cap = max(128, min(1024, ((n // 2) // 128) * 128))
        tile_j = _pick_tile(n, cap, 128)

    mu_iv, nh_iv, rcq, pos = _head(x, y, params, tile_b=tile_b)

    # TODO(synk): operand packing (concat/transpose, O(N*D)) and the final O(N)
    # mean / log(N-1) constant stay in XLA glue.
    a = jnp.concatenate([mu_iv, nh_iv], axis=1)           # (N, 2D) MXU LHS
    yb_t = jnp.concatenate([y, y * y], axis=1).T          # (2D, N) MXU RHS
    lse = _masked_lse(yb_t, a, rcq, tile_i=tile_i, tile_j=tile_j)

    positive = pos[:, 0]                                  # (N,)
    negative = lse[0] - math.log(n - 1.0)                 # (N,)
    return jnp.mean(positive - negative)


# ---- pure-JAX reference (mirrors the PyTorch forward) ------------------------
def l1out_forward_ref(x, y, params):
    n = y.shape[0]
    hi = jax.lax.Precision.HIGHEST      # keep the f32 reference matmuls exact

    def mlp(v, w1, b1, w2, b2):
        h = jnp.maximum(jnp.dot(v, w1, precision=hi) + b1, 0.0)
        return jnp.dot(h, w2, precision=hi) + b2

    mu = mlp(x, params["w1_mu"], params["b1_mu"], params["w2_mu"], params["b2_mu"])
    logvar = jnp.tanh(mlp(x, params["w1_lv"], params["b1_lv"],
                          params["w2_lv"], params["b2_lv"]))

    positive = jnp.sum(-(mu - y) ** 2 / 2.0 / jnp.exp(logvar) - logvar / 2.0, axis=-1)

    mu_1 = mu[:, None, :]
    logvar_1 = logvar[:, None, :]
    y_1 = y[None, :, :]
    all_probs = jnp.sum(-(y_1 - mu_1) ** 2 / 2.0 / jnp.exp(logvar_1) - logvar_1 / 2.0,
                        axis=-1)                                        # (N, N)

    # NOTE: the PyTorch source builds diag_mask with an extra unsqueeze(-1); the
    # estimator's intent (cf. the "# [nsample]" comments in the original code) is
    # the standard leave-one-out bound over the (N, N) matrix with the diagonal
    # masked to -20, which is what this reference and the Pallas kernels compute.
    diag_mask = jnp.eye(n, dtype=jnp.float32) * -20.0
    negative = jax.scipy.special.logsumexp(all_probs + diag_mask, axis=0) \
        - math.log(n - 1.0)
    return jnp.mean(positive - negative)


if __name__ == "__main__":
    def init_params(key, x_dim, y_dim, hidden_size):
        hh = hidden_size // 2
        ks = jax.random.split(key, 8)

        def linear(kw, kb, fan_in, fan_out):
            bound = 1.0 / math.sqrt(fan_in)            # torch.nn.Linear default scale
            w = jax.random.uniform(kw, (fan_in, fan_out), jnp.float32, -bound, bound)
            b = jax.random.uniform(kb, (1, fan_out), jnp.float32, -bound, bound)
            return w, b

        w1m, b1m = linear(ks[0], ks[1], x_dim, hh)
        w2m, b2m = linear(ks[2], ks[3], hh, y_dim)
        w1v, b1v = linear(ks[4], ks[5], x_dim, hh)
        w2v, b2v = linear(ks[6], ks[7], hh, y_dim)
        return dict(w1_mu=w1m, b1_mu=b1m, w2_mu=w2m, b2_mu=b2m,
                    w1_lv=w1v, b1_lv=b1v, w2_lv=w2v, b2_lv=b2v)

    key = jax.random.PRNGKey(0)

    # (N, x_dim, y_dim, hidden, tile_i, tile_j): a small single-j-tile case plus a
    # case that exercises the 2-D (parallel-j, reduction-i) grid, the LSE carry,
    # and both the diagonal-masked and mask-free pl.when branches.
    cases = [
        (16, 10, 8, 32, 8, None),
        (256, 32, 16, 64, 64, 128),
    ]
    for (N, x_dim, y_dim, hidden, ti, tj) in cases:
        key, kp, kx, ky = jax.random.split(key, 4)
        params = init_params(kp, x_dim, y_dim, hidden)
        x = jax.random.normal(kx, (N, x_dim), jnp.float32)
        y = jax.random.normal(ky, (N, y_dim), jnp.float32)

        out = jax.block_until_ready(l1out_forward(x, y, params, tile_i=ti, tile_j=tj))
        ref = jax.block_until_ready(l1out_forward_ref(x, y, params))
        err = abs(float(out) - float(ref))
        assert err < 1e-3 * max(1.0, abs(float(ref))), (N, float(out), float(ref), err)

    print("KERNEL_OK")
</pallas_src>

<mosaic_0001>
module attributes {stable_mosaic.version = 11 : i64} {
  func.func @_head_kernel(%arg0: i32, %arg1: memref<16x10xf32, #tpu.memory_space<vmem>>, %arg2: memref<16x8xf32, #tpu.memory_space<vmem>>, %arg3: memref<10x16xf32, #tpu.memory_space<vmem>>, %arg4: memref<1x16xf32, #tpu.memory_space<vmem>>, %arg5: memref<16x8xf32, #tpu.memory_space<vmem>>, %arg6: memref<1x8xf32, #tpu.memory_space<vmem>>, %arg7: memref<10x16xf32, #tpu.memory_space<vmem>>, %arg8: memref<1x16xf32, #tpu.memory_space<vmem>>, %arg9: memref<16x8xf32, #tpu.memory_space<vmem>>, %arg10: memref<1x8xf32, #tpu.memory_space<vmem>>, %arg11: memref<16x8xf32, #tpu.memory_space<vmem>>, %arg12: memref<16x8xf32, #tpu.memory_space<vmem>>, %arg13: memref<16x1xf32, #tpu.memory_space<vmem>>, %arg14: memref<16x1xf32, #tpu.memory_space<vmem>>) attributes {dimension_semantics = [#tpu.dimension_semantics<parallel>], iteration_bounds = array<i64: 1>, scalar_prefetch = 0 : i64, scratch_operands = 0 : i64, tpu.core_type = #tpu.core_type<tc>, window_params = [{transform_indices = @transform_0, window_bounds = array<i64: 16, 10>}, {transform_indices = @transform_1, window_bounds = array<i64: 16, 8>}, {pipeline_mode = #tpu.pipeline_mode<synchronous>, transform_indices = @transform_2, window_bounds = array<i64: 10, 16>}, {pipeline_mode = #tpu.pipeline_mode<synchronous>, transform_indices = @transform_3, window_bounds = array<i64: 1, 16>}, {pipeline_mode = #tpu.pipeline_mode<synchronous>, transform_indices = @transform_4, window_bounds = array<i64: 16, 8>}, {pipeline_mode = #tpu.pipeline_mode<synchronous>, transform_indices = @transform_5, window_bounds = array<i64: 1, 8>}, {pipeline_mode = #tpu.pipeline_mode<synchronous>, transform_indices = @transform_6, window_bounds = array<i64: 10, 16>}, {pipeline_mode = #tpu.pipeline_mode<synchronous>, transform_indices = @transform_7, window_bounds = array<i64: 1, 16>}, {pipeline_mode = #tpu.pipeline_mode<synchronous>, transform_indices = @transform_8, window_bounds = array<i64: 16, 8>}, {pipeline_mode = #tpu.pipeline_mode<synchronous>, transform_indices = @transform_9, window_bounds = array<i64: 1, 8>}, {transform_indices = @transform_10, window_bounds = array<i64: 16, 8>}, {transform_indices = @transform_11, window_bounds = array<i64: 16, 8>}, {transform_indices = @transform_12, window_bounds = array<i64: 16, 1>}, {transform_indices = @transform_13, window_bounds = array<i64: 16, 1>}]} {
    %c0 = arith.constant 0 : index
    %c0_0 = arith.constant 0 : index
    %0 = vector.load %arg1[%c0, %c0_0] : memref<16x10xf32, #tpu.memory_space<vmem>>, vector<16x10xf32>
    %c0_1 = arith.constant 0 : index
    %c0_2 = arith.constant 0 : index
    %1 = vector.load %arg2[%c0_1, %c0_2] : memref<16x8xf32, #tpu.memory_space<vmem>>, vector<16x8xf32>
    %c0_3 = arith.constant 0 : index
    %c0_4 = arith.constant 0 : index
    %2 = vector.load %arg3[%c0_3, %c0_4] : memref<10x16xf32, #tpu.memory_space<vmem>>, vector<10x16xf32>
    %cst = arith.constant dense<0.000000e+00> : vector<16x16xf32>
    %3 = tpu.matmul %0, %2, %cst {dimension_numbers = #tpu.dot_dimension_numbers<[1], [0], [0], [1], [0, 0, 1, 1], [], []>} : vector<16x10xf32>, vector<10x16xf32>, vector<16x16xf32> -> vector<16x16xf32>
    %c0_5 = arith.constant 0 : index
    %c0_6 = arith.constant 0 : index
    %4 = vector.load %arg4[%c0_5, %c0_6] : memref<1x16xf32, #tpu.memory_space<vmem>>, vector<1x16xf32>
    %5 = vector.broadcast %4 : vector<1x16xf32> to vector<16x16xf32>
    %6 = arith.addf %3, %5 : vector<16x16xf32>
    %cst_7 = arith.constant 0.000000e+00 : f32
    %7 = vector.broadcast %cst_7 : f32 to vector<16x16xf32>
    %8 = arith.maximumf %6, %7 : vector<16x16xf32>
    %c0_8 = arith.constant 0 : index
    %c0_9 = arith.constant 0 : index
    %9 = vector.load %arg5[%c0_8, %c0_9] : memref<16x8xf32, #tpu.memory_space<vmem>>, vector<16x8xf32>
    %cst_10 = arith.constant dense<0.000000e+00> : vector<16x8xf32>
    %10 = tpu.matmul %8, %9, %cst_10 {dimension_numbers = #tpu.dot_dimension_numbers<[1], [0], [0], [1], [0, 0, 1, 1], [], []>} : vector<16x16xf32>, vector<16x8xf32>, vector<16x8xf32> -> vector<16x8xf32>
    %c0_11 = arith.constant 0 : index
    %c0_12 = arith.constant 0 : index
    %11 = vector.load %arg6[%c0_11, %c0_12] : memref<1x8xf32, #tpu.memory_space<vmem>>, vector<1x8xf32>
    %12 = vector.broadcast %11 : vector<1x8xf32> to vector<16x8xf32>
    %13 = arith.addf %10, %12 : vector<16x8xf32>
    %c0_13 = arith.constant 0 : index
    %c0_14 = arith.constant 0 : index
    %14 = vector.load %arg7[%c0_13, %c0_14] : memref<10x16xf32, #tpu.memory_space<vmem>>, vector<10x16xf32>
    %cst_15 = arith.constant dense<0.000000e+00> : vector<16x16xf32>
    %15 = tpu.matmul %0, %14, %cst_15 {dimension_numbers = #tpu.dot_dimension_numbers<[1], [0], [0], [1], [0, 0, 1, 1], [], []>} : vector<16x10xf32>, vector<10x16xf32>, vector<16x16xf32> -> vector<16x16xf32>
    %c0_16 = arith.constant 0 : index
    %c0_17 = arith.constant 0 : index
    %16 = vector.load %arg8[%c0_16, %c0_17] : memref<1x16xf32, #tpu.memory_space<vmem>>, vector<1x16xf32>
    %17 = vector.broadcast %16 : vector<1x16xf32> to vector<16x16xf32>
    %18 = arith.addf %15, %17 : vector<16x16xf32>
    %cst_18 = arith.constant 0.000000e+00 : f32
    %19 = vector.broadcast %cst_18 : f32 to vector<16x16xf32>
    %20 = arith.maximumf %18, %19 : vector<16x16xf32>
    %c0_19 = arith.constant 0 : index
    %c0_20 = arith.constant 0 : index
    %21 = vector.load %arg9[%c0_19, %c0_20] : memref<16x8xf32, #tpu.memory_space<vmem>>, vector<16x8xf32>
    %cst_21 = arith.constant dense<0.000000e+00> : vector<16x8xf32>
    %22 = tpu.matmul %20, %21, %cst_21 {dimension_numbers = #tpu.dot_dimension_numbers<[1], [0], [0], [1], [0, 0, 1, 1], [], []>} : vector<16x16xf32>, vector<16x8xf32>, vector<16x8xf32> -> vector<16x8xf32>
    %c0_22 = arith.constant 0 : index
    %c0_23 = arith.constant 0 : index
    %23 = vector.load %arg10[%c0_22, %c0_23] : memref<1x8xf32, #tpu.memory_space<vmem>>, vector<1x8xf32>
    %24 = vector.broadcast %23 : vector<1x8xf32> to vector<16x8xf32>
    %25 = arith.addf %22, %24 : vector<16x8xf32>
    %26 = math.tanh %25 : vector<16x8xf32>
    %cst_24 = arith.constant 0.000000e+00 : f32
    %27 = vector.broadcast %cst_24 : f32 to vector<16x8xf32>
    %28 = arith.subf %27, %26 : vector<16x8xf32>
    %29 = math.exp %28 : vector<16x8xf32>
    %30 = arith.mulf %13, %29 : vector<16x8xf32>
    %c0_25 = arith.constant 0 : index
    %c0_26 = arith.constant 0 : index
    %31 = vector.load %arg11[%c0_25, %c0_26] : memref<16x8xf32, #tpu.memory_space<vmem>>, vector<16x8xf32>
    tpu.vector_store %arg11[%c0_25, %c0_26], %30 {strides = array<i32>} : memref<16x8xf32, #tpu.memory_space<vmem>>, vector<16x8xf32>,
    %cst_27 = arith.constant -5.000000e-01 : f32
    %32 = vector.broadcast %cst_27 : f32 to vector<16x8xf32>
    %33 = arith.mulf %32, %29 : vector<16x8xf32>
    %c0_28 = arith.constant 0 : index
    %c0_29 = arith.constant 0 : index
    %34 = vector.load %arg12[%c0_28, %c0_29] : memref<16x8xf32, #tpu.memory_space<vmem>>, vector<16x8xf32>
    tpu.vector_store %arg12[%c0_28, %c0_29], %33 {strides = array<i32>} : memref<16x8xf32, #tpu.memory_space<vmem>>, vector<16x8xf32>,
    %cst_30 = arith.constant dense<0.000000e+00> : vector<16xf32>
    %35 = vector.multi_reduction <add>, %26, %cst_30 [1] : vector<16x8xf32> to vector<16xf32>
    %36 = vector.shape_cast %35 : vector<16xf32> to vector<16x1xf32>
    %37 = arith.mulf %13, %30 : vector<16x8xf32>
    %cst_31 = arith.constant dense<0.000000e+00> : vector<16xf32>
    %38 = vector.multi_reduction <add>, %37, %cst_31 [1] : vector<16x8xf32> to vector<16xf32>
    %39 = vector.shape_cast %38 : vector<16xf32> to vector<16x1xf32>
    %40 = arith.addf %36, %39 : vector<16x1xf32>
    %cst_32 = arith.constant -5.000000e-01 : f32
    %41 = vector.broadcast %cst_32 : f32 to vector<16x1xf32>
    %42 = arith.mulf %41, %40 : vector<16x1xf32>
    %c0_33 = arith.constant 0 : index
    %c0_34 = arith.constant 0 : index
    %43 = vector.load %arg13[%c0_33, %c0_34] : memref<16x1xf32, #tpu.memory_space<vmem>>, vector<16x1xf32>
    tpu.vector_store %arg13[%c0_33, %c0_34], %42 {strides = array<i32>} : memref<16x1xf32, #tpu.memory_space<vmem>>, vector<16x1xf32>,
    %44 = arith.subf %13, %1 : vector<16x8xf32>
    %45 = arith.mulf %44, %44 : vector<16x8xf32>
    %cst_35 = arith.constant -5.000000e-01 : f32
    %46 = vector.broadcast %cst_35 : f32 to vector<16x8xf32>
    %47 = arith.mulf %46, %45 : vector<16x8xf32>
    %48 = arith.mulf %47, %29 : vector<16x8xf32>
    %cst_36 = arith.constant 5.000000e-01 : f32
    %49 = vector.broadcast %cst_36 : f32 to vector<16x8xf32>
    %50 = arith.mulf %49, %26 : vector<16x8xf32>
    %51 = arith.subf %48, %50 : vector<16x8xf32>
    %cst_37 = arith.constant dense<0.000000e+00> : vector<16xf32>
    %52 = vector.multi_reduction <add>, %51, %cst_37 [1] : vector<16x8xf32> to vector<16xf32>
    %53 = vector.shape_cast %52 : vector<16xf32> to vector<16x1xf32>
    %c0_38 = arith.constant 0 : index
    %c0_39 = arith.constant 0 : index
    %54 = vector.load %arg14[%c0_38, %c0_39] : memref<16x1xf32, #tpu.memory_space<vmem>>, vector<16x1xf32>
    tpu.vector_store %arg14[%c0_38, %c0_39], %53 {strides = array<i32>} : memref<16x1xf32, #tpu.memory_space<vmem>>, vector<16x1xf32>,
    return
  }
  func.func @transform_0(%arg0: i32) -> (i32, i32) {
    %c0_i32 = arith.constant 0 : i32
    %c0_i32_0 = arith.constant 0 : i32
    return %arg0, %c0_i32 : i32, i32
  }
  func.func @transform_1(%arg0: i32) -> (i32, i32) {
    %c0_i32 = arith.constant 0 : i32
    %c0_i32_0 = arith.constant 0 : i32
    return %arg0, %c0_i32 : i32, i32
  }
  func.func @transform_2(%arg0: i32) -> (i32, i32) {
    %c0_i32 = arith.constant 0 : i32
    %c0_i32_0 = arith.constant 0 : i32
    %c0_i32_1 = arith.constant 0 : i32
    return %c0_i32, %c0_i32_0 : i32, i32
  }
  func.func @transform_3(%arg0: i32) -> (i32, i32) {
    %c0_i32 = arith.constant 0 : i32
    %c0_i32_0 = arith.constant 0 : i32
    %c0_i32_1 = arith.constant 0 : i32
    return %c0_i32, %c0_i32_0 : i32, i32
  }
  func.func @transform_4(%arg0: i32) -> (i32, i32) {
    %c0_i32 = arith.constant 0 : i32
    %c0_i32_0 = arith.constant 0 : i32
    %c0_i32_1 = arith.constant 0 : i32
    return %c0_i32, %c0_i32_0 : i32, i32
  }
  func.func @transform_5(%arg0: i32) -> (i32, i32) {
    %c0_i32 = arith.constant 0 : i32
    %c0_i32_0 = arith.constant 0 : i32
    %c0_i32_1 = arith.constant 0 : i32
    return %c0_i32, %c0_i32_0 : i32, i32
  }
  func.func @transform_6(%arg0: i32) -> (i32, i32) {
    %c0_i32 = arith.constant 0 : i32
    %c0_i32_0 = arith.constant 0 : i32
    %c0_i32_1 = arith.constant 0 : i32
    return %c0_i32, %c0_i32_0 : i32, i32
  }
  func.func @transform_7(%arg0: i32) -> (i32, i32) {
    %c0_i32 = arith.constant 0 : i32
    %c0_i32_0 = arith.constant 0 : i32
    %c0_i32_1 = arith.constant 0 : i32
    return %c0_i32, %c0_i32_0 : i32, i32
  }
  func.func @transform_8(%arg0: i32) -> (i32, i32) {
    %c0_i32 = arith.constant 0 : i32
    %c0_i32_0 = arith.constant 0 : i32
    %c0_i32_1 = arith.constant 0 : i32
    return %c0_i32, %c0_i32_0 : i32, i32
  }
  func.func @transform_9(%arg0: i32) -> (i32, i32) {
    %c0_i32 = arith.constant 0 : i32
    %c0_i32_0 = arith.constant 0 : i32
    %c0_i32_1 = arith.constant 0 : i32
    return %c0_i32, %c0_i32_0 : i32, i32
  }
  func.func @transform_10(%arg0: i32) -> (i32, i32) {
    %c0_i32 = arith.constant 0 : i32
    %c0_i32_0 = arith.constant 0 : i32
    return %arg0, %c0_i32 : i32, i32
  }
  func.func @transform_11(%arg0: i32) -> (i32, i32) {
    %c0_i32 = arith.constant 0 : i32
    %c0_i32_0 = arith.constant 0 : i32
    return %arg0, %c0_i32 : i32, i32
  }
  func.func @transform_12(%arg0: i32) -> (i32, i32) {
    %c0_i32 = arith.constant 0 : i32
    %c0_i32_0 = arith.constant 0 : i32
    return %arg0, %c0_i32 : i32, i32
  }
  func.func @transform_13(%arg0: i32) -> (i32, i32) {
    %c0_i32 = arith.constant 0 : i32
    %c0_i32_0 = arith.constant 0 : i32
    return %arg0, %c0_i32 : i32, i32
  }
}

module attributes {stable_mosaic.version = 11 : i64} {
  func.func @_pair_kernel(%arg0: i32, %arg1: i32, %arg2: memref<16x16xf32, #tpu.memory_space<vmem>>, %arg3: memref<8x16xf32, #tpu.memory_space<vmem>>, %arg4: memref<8x1xf32, #tpu.memory_space<vmem>>, %arg5: memref<1x16xf32, #tpu.memory_space<vmem>>, %arg6: memref<1x16xf32, #tpu.memory_space<vmem>>, %arg7: memref<1x16xf32, #tpu.memory_space<vmem>>) attributes {dimension_semantics = [#tpu.dimension_semantics<parallel>, #tpu.dimension_semantics<arbitrary>], iteration_bounds = array<i64: 1, 2>, scalar_prefetch = 0 : i64, scratch_operands = 2 : i64, tpu.core_type = #tpu.core_type<tc>, window_params = [{transform_indices = @transform_0, window_bounds = array<i64: 16, 16>}, {transform_indices = @transform_1, window_bounds = array<i64: 8, 16>}, {transform_indices = @transform_2, window_bounds = array<i64: 8, 1>}, {transform_indices = @transform_3, window_bounds = array<i64: 1, 16>}]} {
    %c0_i32 = arith.constant 0 : i32
    %0 = arith.cmpi eq, %arg1, %c0_i32 : i32
    %1 = arith.extui %0 : i1 to i32
    %c0_i32_0 = arith.constant 0 : i32
    %2 = arith.cmpi ne, %1, %c0_i32_0 : i32
    scf.if %2 {
      %cst_13 = arith.constant 0xFF800000 : f32
      %26 = vector.broadcast %cst_13 : f32 to vector<1x16xf32>
      %c0_14 = arith.constant 0 : index
      %c0_15 = arith.constant 0 : index
      %27 = vector.load %arg6[%c0_14, %c0_15] : memref<1x16xf32, #tpu.memory_space<vmem>>, vector<1x16xf32>
      tpu.vector_store %arg6[%c0_14, %c0_15], %26 {strides = array<i32>} : memref<1x16xf32, #tpu.memory_space<vmem>>, vector<1x16xf32>,
      %cst_16 = arith.constant 0.000000e+00 : f32
      %28 = vector.broadcast %cst_16 : f32 to vector<1x16xf32>
      %c0_17 = arith.constant 0 : index
      %c0_18 = arith.constant 0 : index
      %29 = vector.load %arg7[%c0_17, %c0_18] : memref<1x16xf32, #tpu.memory_space<vmem>>, vector<1x16xf32>
      tpu.vector_store %arg7[%c0_17, %c0_18], %28 {strides = array<i32>} : memref<1x16xf32, #tpu.memory_space<vmem>>, vector<1x16xf32>,
    } else {
    }
    %c0 = arith.constant 0 : index
    %c0_1 = arith.constant 0 : index
    %3 = vector.load %arg3[%c0, %c0_1] : memref<8x16xf32, #tpu.memory_space<vmem>>, vector<8x16xf32>
    %c0_2 = arith.constant 0 : index
    %c0_3 = arith.constant 0 : index
    %4 = vector.load %arg2[%c0_2, %c0_3] : memref<16x16xf32, #tpu.memory_space<vmem>>, vector<16x16xf32>
    %cst = arith.constant dense<0.000000e+00> : vector<8x16xf32>
    %5 = tpu.matmul %3, %4, %cst {dimension_numbers = #tpu.dot_dimension_numbers<[1], [0], [0], [1], [0, 0, 1, 1], [], []>} : vector<8x16xf32>, vector<16x16xf32>, vector<8x16xf32> -> vector<8x16xf32>
    %c0_4 = arith.constant 0 : index
    %c0_5 = arith.constant 0 : index
    %6 = vector.load %arg4[%c0_4, %c0_5] : memref<8x1xf32, #tpu.memory_space<vmem>>, vector<8x1xf32>
    %7 = vector.broadcast %6 : vector<8x1xf32> to vector<8x16xf32>
    %8 = arith.addf %5, %7 : vector<8x16xf32>
    %c8_i32 = arith.constant 8 : i32
    %9 = arith.muli %arg1, %c8_i32 : i32
    %c1_i32 = arith.constant 1 : i32
    %10 = arith.addi %arg0, %c1_i32 : i32
    %c16_i32 = arith.constant 16 : i32
    %11 = arith.muli %10, %c16_i32 : i32
    %12 = arith.cmpi slt, %9, %11 : i32
    %c16_i32_6 = arith.constant 16 : i32
    %13 = arith.muli %arg0, %c16_i32_6 : i32
    %c1_i32_7 = arith.constant 1 : i32
    %14 = arith.addi %arg1, %c1_i32_7 : i32
    %c8_i32_8 = arith.constant 8 : i32
    %15 = arith.muli %14, %c8_i32_8 : i32
    %16 = arith.cmpi slt, %13, %15 : i32
    %17 = arith.andi %12, %16 : i1
    %18 = arith.extui %17 : i1 to i32
    %c0_i32_9 = arith.constant 0 : i32
    %19 = arith.cmpi ne, %18, %c0_i32_9 : i32
    scf.if %19 {
      %c8_i32_13 = arith.constant 8 : i32
      %26 = arith.muli %arg1, %c8_i32_13 : i32
      %27 = tpu.iota {dimensions = array<i32: 0>} : vector<8x16xi32>
      %28 = vector.broadcast %26 : i32 to vector<8x16xi32>
      %29 = arith.addi %28, %27 : vector<8x16xi32>
      %c16_i32_14 = arith.constant 16 : i32
      %30 = arith.muli %arg0, %c16_i32_14 : i32
      %31 = tpu.iota {dimensions = array<i32: 1>} : vector<8x16xi32>
      %32 = vector.broadcast %30 : i32 to vector<8x16xi32>
      %33 = arith.addi %32, %31 : vector<8x16xi32>
      %34 = arith.cmpi eq, %29, %33 : vector<8x16xi32>
      %cst_15 = arith.constant -2.000000e+01 : f32
      %cst_16 = arith.constant 0.000000e+00 : f32
      %35 = vector.broadcast %cst_15 : f32 to vector<8x16xf32>
      %36 = vector.broadcast %cst_16 : f32 to vector<8x16xf32>
      %37 = arith.select %34, %35, %36 : vector<8x16xi1>, vector<8x16xf32>
      %38 = arith.addf %8, %37 : vector<8x16xf32>
      %cst_17 = arith.constant dense<0xFF800000> : vector<16xf32>
      %39 = vector.multi_reduction <maximumf>, %38, %cst_17 [0] : vector<8x16xf32> to vector<16xf32>
      %40 = vector.shape_cast %39 : vector<16xf32> to vector<1x16xf32>
      %c0_18 = arith.constant 0 : index
      %c0_19 = arith.constant 0 : index
      %41 = vector.load %arg6[%c0_18, %c0_19] : memref<1x16xf32, #tpu.memory_space<vmem>>, vector<1x16xf32>
      %42 = arith.maximumf %41, %40 : vector<1x16xf32>
      %c0_20 = arith.constant 0 : index
      %c0_21 = arith.constant 0 : index
      %43 = vector.load %arg7[%c0_20, %c0_21] : memref<1x16xf32, #tpu.memory_space<vmem>>, vector<1x16xf32>
      %c0_22 = arith.constant 0 : index
      %c0_23 = arith.constant 0 : index
      %44 = vector.load %arg6[%c0_22, %c0_23] : memref<1x16xf32, #tpu.memory_space<vmem>>, vector<1x16xf32>
      %45 = arith.subf %44, %42 : vector<1x16xf32>
      %46 = math.exp %45 : vector<1x16xf32>
      %47 = arith.mulf %43, %46 : vector<1x16xf32>
      %48 = vector.broadcast %42 : vector<1x16xf32> to vector<8x16xf32>
      %49 = arith.subf %38, %48 : vector<8x16xf32>
      %50 = math.exp %49 : vector<8x16xf32>
      %cst_24 = arith.constant dense<0.000000e+00> : vector<16xf32>
      %51 = vector.multi_reduction <add>, %50, %cst_24 [0] : vector<8x16xf32> to vector<16xf32>
      %52 = vector.shape_cast %51 : vector<16xf32> to vector<1x16xf32>
      %53 = arith.addf %47, %52 : vector<1x16xf32>
      %c0_25 = arith.constant 0 : index
      %c0_26 = arith.constant 0 : index
      %54 = vector.load %arg7[%c0_25, %c0_26] : memref<1x16xf32, #tpu.memory_space<vmem>>, vector<1x16xf32>
      tpu.vector_store %arg7[%c0_25, %c0_26], %53 {strides = array<i32>} : memref<1x16xf32, #tpu.memory_space<vmem>>, vector<1x16xf32>,
      %c0_27 = arith.constant 0 : index
      %c0_28 = arith.constant 0 : index
      %55 = vector.load %arg6[%c0_27, %c0_28] : memref<1x16xf32, #tpu.memory_space<vmem>>, vector<1x16xf32>
      tpu.vector_store %arg6[%c0_27, %c0_28], %42 {strides = array<i32>} : memref<1x16xf32, #tpu.memory_space<vmem>>, vector<1x16xf32>,
    } else {
    }
    %true = arith.constant true
    %20 = arith.xori %17, %true : i1
    %21 = arith.extui %20 : i1 to i32
    %c0_i32_10 = arith.constant 0 : i32
    %22 = arith.cmpi ne, %21, %c0_i32_10 : i32
    scf.if %22 {
      %cst_13 = arith.constant dense<0xFF800000> : vector<16xf32>
      %26 = vector.multi_reduction <maximumf>, %8, %cst_13 [0] : vector<8x16xf32> to vector<16xf32>
      %27 = vector.shape_cast %26 : vector<16xf32> to vector<1x16xf32>
      %c0_14 = arith.constant 0 : index
      %c0_15 = arith.constant 0 : index
      %28 = vector.load %arg6[%c0_14, %c0_15] : memref<1x16xf32, #tpu.memory_space<vmem>>, vector<1x16xf32>
      %29 = arith.maximumf %28, %27 : vector<1x16xf32>
      %c0_16 = arith.constant 0 : index
      %c0_17 = arith.constant 0 : index
      %30 = vector.load %arg7[%c0_16, %c0_17] : memref<1x16xf32, #tpu.memory_space<vmem>>, vector<1x16xf32>
      %c0_18 = arith.constant 0 : index
      %c0_19 = arith.constant 0 : index
      %31 = vector.load %arg6[%c0_18, %c0_19] : memref<1x16xf32, #tpu.memory_space<vmem>>, vector<1x16xf32>
      %32 = arith.subf %31, %29 : vector<1x16xf32>
      %33 = math.exp %32 : vector<1x16xf32>
      %34 = arith.mulf %30, %33 : vector<1x16xf32>
      %35 = vector.broadcast %29 : vector<1x16xf32> to vector<8x16xf32>
      %36 = arith.subf %8, %35 : vector<8x16xf32>
      %37 = math.exp %36 : vector<8x16xf32>
      %cst_20 = arith.constant dense<0.000000e+00> : vector<16xf32>
      %38 = vector.multi_reduction <add>, %37, %cst_20 [0] : vector<8x16xf32> to vector<16xf32>
      %39 = vector.shape_cast %38 : vector<16xf32> to vector<1x16xf32>
      %40 = arith.addf %34, %39 : vector<1x16xf32>
      %c0_21 = arith.constant 0 : index
      %c0_22 = arith.constant 0 : index
      %41 = vector.load %arg7[%c0_21, %c0_22] : memref<1x16xf32, #tpu.memory_space<vmem>>, vector<1x16xf32>
      tpu.vector_store %arg7[%c0_21, %c0_22], %40 {strides = array<i32>} : memref<1x16xf32, #tpu.memory_space<vmem>>, vector<1x16xf32>,
      %c0_23 = arith.constant 0 : index
      %c0_24 = arith.constant 0 : index
      %42 = vector.load %arg6[%c0_23, %c0_24] : memref<1x16xf32, #tpu.memory_space<vmem>>, vector<1x16xf32>
      tpu.vector_store %arg6[%c0_23, %c0_24], %29 {strides = array<i32>} : memref<1x16xf32, #tpu.memory_space<vmem>>, vector<1x16xf32>,
    } else {
    }
    %c1_i32_11 = arith.constant 1 : i32
    %23 = arith.cmpi eq, %arg1, %c1_i32_11 : i32
    %24 = arith.extui %23 : i1 to i32
    %c0_i32_12 = arith.constant 0 : i32
    %25 = arith.cmpi ne, %24, %c0_i32_12 : i32
    scf.if %25 {
      %c0_13 = arith.constant 0 : index
      %c0_14 = arith.constant 0 : index
      %26 = vector.load %arg6[%c0_13, %c0_14] : memref<1x16xf32, #tpu.memory_space<vmem>>, vector<1x16xf32>
      %c0_15 = arith.constant 0 : index
      %c0_16 = arith.constant 0 : index
      %27 = vector.load %arg7[%c0_15, %c0_16] : memref<1x16xf32, #tpu.memory_space<vmem>>, vector<1x16xf32>
      %28 = math.log %27 : vector<1x16xf32>
      %29 = arith.addf %26, %28 : vector<1x16xf32>
      %c0_17 = arith.constant 0 : index
      %c0_18 = arith.constant 0 : index
      %30 = vector.load %arg5[%c0_17, %c0_18] : memref<1x16xf32, #tpu.memory_space<vmem>>, vector<1x16xf32>
      tpu.vector_store %arg5[%c0_17, %c0_18], %29 {strides = array<i32>} : memref<1x16xf32, #tpu.memory_space<vmem>>, vector<1x16xf32>,
    } else {
    }
    return
  }
  func.func @transform_0(%arg0: i32, %arg1: i32) -> (i32, i32) {
    %c0_i32 = arith.constant 0 : i32
    %c0_i32_0 = arith.constant 0 : i32
    return %c0_i32, %arg0 : i32, i32
  }
  func.func @transform_1(%arg0: i32, %arg1: i32) -> (i32, i32) {
    %c0_i32 = arith.constant 0 : i32
    %c0_i32_0 = arith.constant 0 : i32
    return %arg1, %c0_i32 : i32, i32
  }
  func.func @transform_2(%arg0: i32, %arg1: i32) -> (i32, i32) {
    %c0_i32 = arith.constant 0 : i32
    %c0_i32_0 = arith.constant 0 : i32
    return %arg1, %c0_i32 : i32, i32
  }
  func.func @transform_3(%arg0: i32, %arg1: i32) -> (i32, i32) {
    %c0_i32 = arith.constant 0 : i32
    %c0_i32_0 = arith.constant 0 : i32
    return %c0_i32, %arg0 : i32, i32
  }
}

</mosaic_0001>

<llo_original>
// kernel: mul.1
$region0: #{mul.1}
  #allocation0 [shape = 's32[1]{0}', space=sflag, size = 0x4, scoped, tag = 'scoped memory for mul.1']
  %s0 = inlined_call_operand.vmem [shape: f32[16,8], index: 0, kind: input, shape index: {}, may-alias: {0,1}]
  %s1 = inlined_call_operand.vmem [shape: f32[16,8], index: 1, kind: input, shape index: {}, may-alias: {0,1}]
  %s2 = inlined_call_operand.vmem [shape: f32[16,8], index: 2, kind: output, shape index: {}]
  %v3 = vld [vmem:[%s0] sm:$0xff]
  %v4 = vld [vmem:[%s1] sm:$0xff]
  %5 = xla_tuple %v3, %v4
  %6 = xla_tuple %5
  %v7 = vmul.f32 %v3, %v4
  %8 = xla_tuple %v7
  %9 = vst [vmem:[%s2] sm:$0xff] %v7

// kernel: l1out_forward.3
$region0: #{l1out_forward.3}
  #allocation0 [shape = 'u32[]', space=smem, size = 0x4, offset = 0x4, fixed_abs, tag = 'smem constant byte address 0x4 - core index']
  #allocation1 [shape = 'u32[144,128]{1,0:T(1,128)}', space=vmem, size = 0x12000, scoped, tag = 'internal scratch']
  #allocation2 [shape = 'f32[1,16]{1,0:T(1,128)}', space=vmem, size = 0x200, scoped, tag = 'scratch operand']
  #allocation3 [shape = 'f32[1,16]{1,0:T(1,128)}', space=vmem, size = 0x200, scoped, tag = 'scratch operand']
  %s0 = inlined_call_operand.vmem [shape: f32[16,16], index: 0, kind: input, shape index: {}]
  %s1 = inlined_call_operand.vmem [shape: f32[16,16], index: 1, kind: input, shape index: {}]
  %s2 = inlined_call_operand.vmem [shape: f32[16,1], index: 2, kind: input, shape index: {}]
  %s3 = inlined_call_operand.vmem [shape: f32[1,16], index: 3, kind: output, shape index: {}]
  %s4 = sld [smem:[#allocation0]]
  $region61: #{l1out_forward.3} parent=0
    _
  %s6 = ssub.s32 1, %s4
  %s7 = scalar_select 0, %s6, %s4
  loop: start=0, step=1, limit=4
  $region2: #{l1out_forward.3} parent=0 // loop_pre_header
    _
  $region3: #{l1out_forward.3} parent=0 // loop_header
    %s9 = sphi 0, %s13
    %p10 = scmp.ge.s32.totalorder %s9, 4
    %s16 = sphi 0, %s28
    %s17 = sphi 0, %s24
    %s18 = sphi 0, %s16
    %s19 = sphi 0, %s17
    %s20 = sphi 0, %s18
    %s21 = sphi 0, %s19
    %s31 = sphi 0, %s33
    %s34 = sphi 0, %s31
    %s35 = sphi 0, %s34
    %s51 = sphi 0, %s35
    %s57 = sphi 0, %s59
    %s60 = sphi 0, %s57
    %s61 = sphi 0, %s60
    %s77 = sphi 0, %s61
    %s83 = sphi 0, %s85
    %s86 = sphi 0, %s83
    %s87 = sphi 0, %s86
    %s103 = sphi 0, %s87
    %s109 = sphi 0, %s111
    %s112 = sphi 0, %s109
    %s113 = sphi 0, %s112
    %s129 = sphi 0, %s113
  $region4: #{l1out_forward.3} parent=0 // loop_header_branch
    %12 = sbr.rel (%p10) target = $region8
  $region5: #{l1out_forward.3} parent=0 // loop_body
    %s14 = ssub.s32 %s9, 1
    %s15 = ssub.s32 %s9, 2
    %s22 = sadd.s32 1, %s17
    %p23 = scmp.ge.s32.totalorder %s22, 2
    %s24 = scalar_select %p23, 0, %s22
    %s25 = sadd.s32 1, %s16
    %s26 = scalar_select %p23, %s25, %s16
    %p27 = scmp.ge.s32.totalorder %s26, 1
    %s28 = scalar_select %p27, 0, %s26
    %s29 = ssub.s32 %s16, %s28
    %p30 = scmp.eq.s32.totalorder %s29, 0
    %s32 = sadd.s32 %s31, 1
    %s33 = scalar_select %p30, %s31, %s32
    %p36 = pneg %p30
    %p37 = scmp.eq.s32.totalorder %s9, 1
    %p38 = por %p36, %p37
    %p39 = scmp.ne.s32.totalorder %s31, %s34
    %p40 = scmp.eq.s32.totalorder %s9, 0
    %p41 = por %p39, %p40
    %p42 = scmp.ne.s32.totalorder %s31, %s34
    %p43 = scmp.eq.s32.totalorder %s14, 1
    %p44 = por %p42, %p43
    %p45 = scmp.ne.s32.totalorder %s34, %s35
    %p46 = scmp.eq.s32.totalorder %s14, 0
    %p47 = por %p45, %p46
    %p48 = scmp.ne.s32.totalorder %s34, %s35
    %p49 = scmp.eq.s32.totalorder %s15, 1
    %p50 = por %p48, %p49
    %p52 = scmp.ne.s32.totalorder %s35, %s51
    %p53 = scmp.eq.s32.totalorder %s15, 0
    %p54 = por %p52, %p53
    %s55 = ssub.s32 %s17, %s24
    %p56 = scmp.eq.s32.totalorder %s55, 0
    %s58 = sadd.s32 %s57, 1
    %s59 = scalar_select %p56, %s57, %s58
    %p62 = pneg %p56
    %p63 = scmp.eq.s32.totalorder %s9, 1
    %p64 = por %p62, %p63
    %p65 = scmp.ne.s32.totalorder %s57, %s60
    %p66 = scmp.eq.s32.totalorder %s9, 0
    %p67 = por %p65, %p66
    %p68 = scmp.ne.s32.totalorder %s57, %s60
    %p69 = scmp.eq.s32.totalorder %s14, 1
    %p70 = por %p68, %p69
    %p71 = scmp.ne.s32.totalorder %s60, %s61
    %p72 = scmp.eq.s32.totalorder %s14, 0
    %p73 = por %p71, %p72
    %p74 = scmp.ne.s32.totalorder %s60, %s61
    %p75 = scmp.eq.s32.totalorder %s15, 1
    %p76 = por %p74, %p75
    %p78 = scmp.ne.s32.totalorder %s61, %s77
    %p79 = scmp.eq.s32.totalorder %s15, 0
    %p80 = por %p78, %p79
    %s81 = ssub.s32 %s17, %s24
    %p82 = scmp.eq.s32.totalorder %s81, 0
    %s84 = sadd.s32 %s83, 1
    %s85 = scalar_select %p82, %s83, %s84
    %p88 = pneg %p82
    %p89 = scmp.eq.s32.totalorder %s9, 1
    %p90 = por %p88, %p89
    %p91 = scmp.ne.s32.totalorder %s83, %s86
    %p92 = scmp.eq.s32.totalorder %s9, 0
    %p93 = por %p91, %p92
    %p94 = scmp.ne.s32.totalorder %s83, %s86
    %p95 = scmp.eq.s32.totalorder %s14, 1
    %p96 = por %p94, %p95
    %p97 = scmp.ne.s32.totalorder %s86, %s87
    %p98 = scmp.eq.s32.totalorder %s14, 0
    %p99 = por %p97, %p98
    %p100 = scmp.ne.s32.totalorder %s86, %s87
    %p101 = scmp.eq.s32.totalorder %s15, 1
    %p102 = por %p100, %p101
    %p104 = scmp.ne.s32.totalorder %s87, %s103
    %p105 = scmp.eq.s32.totalorder %s15, 0
    %p106 = por %p104, %p105
    %s107 = ssub.s32 %s16, %s28
    %p108 = scmp.eq.s32.totalorder %s107, 0
    %s110 = sadd.s32 %s109, 1
    %s111 = scalar_select %p108, %s109, %s110
    %p114 = pneg %p108
    %p115 = scmp.eq.s32.totalorder %s9, 1
    %p116 = por %p114, %p115
    %p117 = scmp.ne.s32.totalorder %s109, %s112
    %p118 = scmp.eq.s32.totalorder %s9, 0
    %p119 = por %p117, %p118
    %p120 = scmp.ne.s32.totalorder %s109, %s112
    %p121 = scmp.eq.s32.totalorder %s14, 1
    %p122 = por %p120, %p121
    %p123 = scmp.ne.s32.totalorder %s112, %s113
    %p124 = scmp.eq.s32.totalorder %s14, 0
    %p125 = por %p123, %p124
    %p126 = scmp.ne.s32.totalorder %s112, %s113
    %p127 = scmp.eq.s32.totalorder %s15, 1
    %p128 = por %p126, %p127
    %p130 = scmp.ne.s32.totalorder %s113, %s129
    %p131 = scmp.eq.s32.totalorder %s15, 0
    %p132 = por %p130, %p131
    %p133 = scmp.le.s32.totalorder 1, %s9
    %p134 = scmp.lt.s32.totalorder %s9, 3
    %p135 = pnand %p133, %p134
    %p136 = pneg %p135
    // Predicated region
    $region9: #{l1out_forward.3} parent=5 // pred_check
      _
    $region10: #{l1out_forward.3} parent=5 // pred_check_branch
      %138 = sbr.rel (%p135) target = $region12
    $region11: #{l1out_forward.3} parent=5 // pred_region
      %s139 = ssub.s32 %s9, 1
      // Predicated region
      $region13: #{l1out_forward.3} parent=11 // pred_check
        %p140 = pneg %p47
      $region14: #{l1out_forward.3} parent=11 // pred_check_branch
        %142 = sbr.rel (%p140) target = $region16
      $region15: #{l1out_forward.3} parent=11 // pred_region
        %p143 = scmp.lt.s32.totalorder %s18, 0
        %s144 = scalar_select %p143, %s18, 0
        %s145 = smul.addr %s144, 8
        %s146 = scalar_lea.vmem %s0, %s145
      $region16: #{l1out_forward.3} parent=11 // pred_fallthru
        _
    $region12: #{l1out_forward.3} parent=5 // pred_fallthru
      _
    %p147 = scmp.lt.s32.totalorder %s9, 2
    // Predicated region
    $region17: #{l1out_forward.3} parent=5 // pred_check
      %p148 = pneg %p147
    $region18: #{l1out_forward.3} parent=5 // pred_check_branch
      %150 = sbr.rel (%p148) target = $region20
    $region19: #{l1out_forward.3} parent=5 // pred_region
      // Predicated region
      $region21: #{l1out_forward.3} parent=19 // pred_check
        %p151 = pneg %p67
      $region22: #{l1out_forward.3} parent=19 // pred_check_branch
        %153 = sbr.rel (%p151) target = $region24
      $region23: #{l1out_forward.3} parent=19 // pred_region
        %p154 = scmp.lt.s32.totalorder %s17, 1
        %s155 = scalar_select %p154, %s17, 1
        %s156 = smul.addr %s155, 8
        %s157 = scalar_lea.vmem %s1, %s156
      $region24: #{l1out_forward.3} parent=19 // pred_fallthru
        _
      // Predicated region
      $region25: #{l1out_forward.3} parent=19 // pred_check
        %p158 = pneg %p93
      $region26: #{l1out_forward.3} parent=19 // pred_check_branch
        %160 = sbr.rel (%p158) target = $region28
      $region27: #{l1out_forward.3} parent=19 // pred_region
        %p161 = scmp.lt.s32.totalorder %s17, 1
        %s162 = scalar_select %p161, %s17, 1
        %s163 = smul.addr %s162, 8
        %s164 = scalar_lea.vmem %s2, %s163
      $region28: #{l1out_forward.3} parent=19 // pred_fallthru
        _
    $region20: #{l1out_forward.3} parent=5 // pred_fallthru
      _
    %p165 = scmp.le.s32.totalorder 1, %s9
    %p166 = scmp.lt.s32.totalorder %s9, 3
    %p167 = pnand %p165, %p166
    %p168 = pneg %p167
    // Predicated region
    $region29: #{l1out_forward.3} parent=5 // pred_check
      _
    $region30: #{l1out_forward.3} parent=5 // pred_check_branch
      %170 = sbr.rel (%p167) target = $region32
    $region31: #{l1out_forward.3} parent=5 // pred_region
      %s171 = ssub.s32 %s9, 1
      %p172 = scmp.lt.s32.totalorder %s18, 0
      %s173 = scalar_select %p172, %s18, 0
      %s174 = smul.addr %s173, 8
      %s175 = scalar_lea.vmem %s0, %s174
      %p176 = pneg %p47
      %p177 = pneg %p44
      %p178 = scmp.lt.s32.totalorder %s19, 1
      %s179 = scalar_select %p178, %s19, 1
      %s180 = smul.addr %s179, 8
      %s181 = scalar_lea.vmem %s1, %s180
      %p182 = pneg %p73
      %p183 = pneg %p70
      %p184 = scmp.lt.s32.totalorder %s19, 1
      %s185 = scalar_select %p184, %s19, 1
      %s186 = smul.addr %s185, 8
      %s187 = scalar_lea.vmem %s2, %s186
      %p188 = pneg %p99
      %p189 = pneg %p96
      %p190 = pneg %p125
      %p191 = pneg %p122
      %p192 = scmp.lt.s32.totalorder %s18, 0
      %s193 = scalar_select %p192, %s18, 0
      %s194 = scalar_lea.vmem %s3, %s193
      %p195 = scmp.lt.s32.totalorder %s18, 0
      %s196 = scalar_select %p195, %s18, 0
      %s197 = smul.addr %s196, 8
      %s198 = scalar_lea.vmem %s0, %s197
      %p199 = scmp.lt.s32.totalorder %s19, 1
      %s200 = scalar_select %p199, %s19, 1
      %s201 = smul.addr %s200, 8
      %s202 = scalar_lea.vmem %s1, %s201
      %p203 = scmp.lt.s32.totalorder %s19, 1
      %s204 = scalar_select %p203, %s19, 1
      %s205 = smul.addr %s204, 8
      %s206 = scalar_lea.vmem %s2, %s205
      %p207 = scmp.lt.s32.totalorder %s18, 0
      %s208 = scalar_select %p207, %s18, 0
      %s209 = scalar_lea.vmem %s3, %s208
      %p210 = scmp.eq.s32.totalorder %s19, 0
      // Predicated region
      $region33: #{l1out_forward.3} parent=31 // pred_check
        %p211 = pneg %p210
      $region34: #{l1out_forward.3} parent=31 // pred_check_branch
        %213 = sbr.rel (%p211) target = $region36
      $region35: #{l1out_forward.3} parent=31 // pred_region
        %vm214 = vcmask 122880
        %215 = vst.msk [vmem:[#allocation2] sm:$0x1] %vm214, -inf
        %216 = vst.msk [vmem:[#allocation3] sm:$0x1] %vm214, 0.0
      $region36: #{l1out_forward.3} parent=31 // pred_fallthru
        _
      %v217 = vld [vmem:[%s202] sm:$0xff]
      %v218 = vld [vmem:[%s198] sm:$0xff]
      %v219 = vld [vmem:[%s198 + $0x8] sm:$0xff]
      %v220 = vld [vmem:[%s206] sm:$0xff]
      %222 = vset.pattern.permute.xlu0 0
      %223 = vperm.xlu0 %222, %v220
      %v224 = vpop.permute.xlu0 %223
      %vm226 = vcmask 130048
      %v228 = vsel %vm226, %v217, 0
      %230 = vmatprep.subr.mxu0 0.0
      %231 = vmatpush1.msra.mxu0 %v218
      %232 = vmatprep.subr.mxu0 0.0
      %233 = vmatpush1.msra.mxu0 %v219
      %234 = vmatprep.subr.mxu0 0.0
      %235 = vmatpush1.msra.mxu0 0.0
      %236 = vmatprep.subr.mxu0 0.0
      %237 = vmatpush1.msra.mxu0 0.0
      %238 = vmatprep.subr.mxu0 0.0
      %239 = vmatpush1.msra.mxu0 0.0
      %240 = vmatprep.subr.mxu0 0.0
      %241 = vmatpush1.msra.mxu0 0.0
      %242 = vmatprep.subr.mxu0 0.0
      %243 = vmatpush1.msra.mxu0 0.0
      %244 = vmatprep.subr.mxu0 0.0
      %245 = vmatpush1.msra.mxu0 0.0
      %246 = vmatprep.subr.mxu0 0.0
      %247 = vmatpush1.msra.mxu0 0.0
      %248 = vmatprep.subr.mxu0 0.0
      %249 = vmatpush1.msra.mxu0 0.0
      %250 = vmatprep.subr.mxu0 0.0
      %251 = vmatpush1.msra.mxu0 0.0
      %252 = vmatprep.subr.mxu0 0.0
      %253 = vmatpush1.msra.mxu0 0.0
      %254 = vmatprep.subr.mxu0 0.0
      %255 = vmatpush1.msra.mxu0 0.0
      %256 = vmatprep.subr.mxu0 0.0
      %257 = vmatpush1.msra.mxu0 0.0
      %258 = vmatprep.subr.mxu0 0.0
      %259 = vmatpush1.msra.mxu0 0.0
      %260 = vmatprep.subr.mxu0 0.0
      %261 = vmatpush1.msra.mxu0 0.0
      %262 = vmatprep.subr.mxu0 0.0
      %263 = vmatpush1.msra.mxu0 0.0
      %264 = vmatprep.subr.mxu0 0.0
      %265 = vmatpush1.msra.mxu0 0.0
      %266 = vmatprep.subr.mxu0 0.0
      %267 = vmatpush1.msra.mxu0 0.0
      %268 = vmatprep.subr.mxu0 0.0
      %269 = vmatpush1.msra.mxu0 0.0
      %270 = vmatprep.subr.mxu0 0.0
      %271 = vmatpush1.msra.mxu0 0.0
      %272 = vmatprep.subr.mxu0 0.0
      %273 = vmatpush1.msra.mxu0 0.0
      %274 = vmatprep.subr.mxu0 0.0
      %275 = vmatpush1.msra.mxu0 0.0
      %276 = vmatprep.subr.mxu0 0.0
      %277 = vmatpush1.msra.mxu0 0.0
      %278 = vmatprep.subr.mxu0 0.0
      %279 = vmatpush1.msra.mxu0 0.0
      %280 = vmatprep.subr.mxu0 0.0
      %281 = vmatpush1.msra.mxu0 0.0
      %282 = vmatprep.subr.mxu0 0.0
      %283 = vmatpush1.msra.mxu0 0.0
      %284 = vmatprep.subr.mxu0 0.0
      %285 = vmatpush1.msra.mxu0 0.0
      %286 = vmatprep.subr.mxu0 0.0
      %287 = vmatpush1.msra.mxu0 0.0
      %288 = vmatprep.subr.mxu0 0.0
      %289 = vmatpush1.msra.mxu0 0.0
      %290 = vmatprep.subr.mxu0 0.0
      %291 = vmatpush1.msra.mxu0 0.0
      %292 = vmatprep.subr.mxu0 0.0
      %293 = vmatpush1.msra.mxu0 0.0
      %294 = vmatprep.mubr.f32.mxu0 0.0
      %295 = vmatmul.mubr.f32.gmra.mrb[0].mxu0 %v228
      %v296 = vpop.f32.mrb[0].mxu0
      %v297 = vadd.f32 %v224, %v296
      %v298 = vpop.f32.mrb[0].mxu0
      %299 = vdwg.mxu0
      %s300 = smul.u32 %s19, 8
      %s301 = sadd.s32 %s18, 1
      %s302 = smul.u32 %s301, 16
      %p303 = scmp.lt.s32.totalorder %s300, %s302
      %s304 = smul.u32 %s18, 16
      %s305 = sadd.s32 %s19, 1
      %s306 = smul.u32 %s305, 8
      %p307 = scmp.lt.s32.totalorder %s304, %s306
      %p308 = pnand %p303, %p307
      %p309 = pneg %p308
      // Predicated region
      $region37: #{l1out_forward.3} parent=31 // pred_check
        _
      $region38: #{l1out_forward.3} parent=31 // pred_check_branch
        %311 = sbr.rel (%p308) target = $region40
      $region39: #{l1out_forward.3} parent=31 // pred_region
        %v312 = vlaneseq
        %v313 = vshrl.u32 %v312, 7
        %v314 = vstv %s300
        %v315 = vadd.s32 %v314, %v313
        %v316 = vlaneseq
        %v317 = vand.u32 %v316, 127
        %v318 = vstv %s304
        %v319 = vadd.s32 %v318, %v317
        %vm320 = vcmp.eq.s32.totalorder %v315, %v319
        %v321 = vsel %vm320, -20.0, 0.0
        %v322 = vadd.f32 %v297, %v321
        %v323 = vsel %vm226, %v322, -inf
        %v324 = vrot.slane %v323, 4
        %v325 = vmax.f32 %v323, %v324
        %v326 = vrot.slane %v325, 2
        %v327 = vmax.f32 %v325, %v326
        %v328 = vrot.slane %v327, 1
        %v329 = vmax.f32 %v327, %v328
        %v330 = vld [vmem:[#allocation2] sm:$0x1]
        %v331 = vmax.f32 %v330, %v329
        %v332 = vld [vmem:[#allocation3] sm:$0x1]
        %v333 = vsub.f32 %v330, %v331
        %v334 = vmul.f32 %v333, 1.442695
        %v335 = vpow.pop %v334
        %v336 = vmul.f32 %v332, %v335
        %v338 = vlaneseq
        %v339 = vshrl.u32 %v338, 7
        %v340 = vsub.s32 0, %v339
        %v341 = vrot.slane %v331, %v340
        %v343 = vsub.f32 %v322, %v341
        %v344 = vmul.f32 %v343, 1.442695
        %v345 = vpow.pop %v344
        %v346 = vsel %vm226, %v345, 0.0
        %v347 = vrot.slane %v346, 4
        %v348 = vadd.f32 %v346, %v347
        %v349 = vrot.slane %v348, 2
        %v350 = vadd.f32 %v348, %v349
        %v351 = vrot.slane %v350, 1
        %v352 = vadd.f32 %v350, %v351
        %v353 = vadd.f32 %v336, %v352
        %vm354 = vcmask 122880
        %355 = vst.msk [vmem:[#allocation3] sm:$0x1] %vm354, %v353
        %356 = vst.msk [vmem:[#allocation2] sm:$0x1] %vm354, %v331
      $region40: #{l1out_forward.3} parent=31 // pred_fallthru
        _
      %p357 = pneg %p309
      // Predicated region
      $region41: #{l1out_forward.3} parent=31 // pred_check
        _
      $region42: #{l1out_forward.3} parent=31 // pred_check_branch
        %359 = sbr.rel (%p309) target = $region44
      $region43: #{l1out_forward.3} parent=31 // pred_region
        %v360 = vsel %vm226, %v297, -inf
        %v361 = vrot.slane %v360, 4
        %v362 = vmax.f32 %v360, %v361
        %v363 = vrot.slane %v362, 2
        %v364 = vmax.f32 %v362, %v363
        %v365 = vrot.slane %v364, 1
        %v366 = vmax.f32 %v364, %v365
        %v367 = vld [vmem:[#allocation2] sm:$0x1]
        %v368 = vmax.f32 %v367, %v366
        %v369 = vld [vmem:[#allocation3] sm:$0x1]
        %v370 = vsub.f32 %v367, %v368
        %v371 = vmul.f32 %v370, 1.442695
        %v372 = vpow.pop %v371
        %v373 = vmul.f32 %v369, %v372
        %v375 = vlaneseq
        %v376 = vshrl.u32 %v375, 7
        %v377 = vsub.s32 0, %v376
        %v378 = vrot.slane %v368, %v377
        %v380 = vsub.f32 %v297, %v378
        %v381 = vmul.f32 %v380, 1.442695
        %v382 = vpow.pop %v381
        %v383 = vsel %vm226, %v382, 0.0
        %v384 = vrot.slane %v383, 4
        %v385 = vadd.f32 %v383, %v384
        %v386 = vrot.slane %v385, 2
        %v387 = vadd.f32 %v385, %v386
        %v388 = vrot.slane %v387, 1
        %v389 = vadd.f32 %v387, %v388
        %v390 = vadd.f32 %v373, %v389
        %vm391 = vcmask 122880
        %392 = vst.msk [vmem:[#allocation3] sm:$0x1] %vm391, %v390
        %393 = vst.msk [vmem:[#allocation2] sm:$0x1] %vm391, %v368
      $region44: #{l1out_forward.3} parent=31 // pred_fallthru
        _
      %p394 = scmp.eq.s32.totalorder %s19, 1
      // Predicated region
      $region45: #{l1out_forward.3} parent=31 // pred_check
        %p395 = pneg %p394
      $region46: #{l1out_forward.3} parent=31 // pred_check_branch
        %397 = sbr.rel (%p395) target = $region48
      $region47: #{l1out_forward.3} parent=31 // pred_region
        %v398 = vld [vmem:[#allocation2] sm:$0x1]
        %v399 = vld [vmem:[#allocation3] sm:$0x1]
        %v400 = vlog2.pop %v399
        %v401 = vmul.f32 %v400, 0.6931472
        %v402 = vadd.f32 %v398, %v401
        %vm403 = vcmask 122880
        %404 = vst.msk [vmem:[%s209] sm:$0x1] %vm403, %v402
      $region48: #{l1out_forward.3} parent=31 // pred_fallthru
        _
      %p405 = scmp.lt.s32.totalorder %s18, 0
      %s406 = scalar_select %p405, %s18, 0
      %s407 = scalar_lea.vmem %s3, %s406
      // Predicated region
      $region49: #{l1out_forward.3} parent=31 // pred_check
        %p408 = pneg %p122
      $region50: #{l1out_forward.3} parent=31 // pred_check_branch
        %410 = sbr.rel (%p408) target = $region52
      $region51: #{l1out_forward.3} parent=31 // pred_region
        _
      $region52: #{l1out_forward.3} parent=31 // pred_fallthru
        _
      // Predicated region
      $region53: #{l1out_forward.3} parent=31 // pred_check
        %p411 = pneg %p122
      $region54: #{l1out_forward.3} parent=31 // pred_check_branch
        %413 = sbr.rel (%p411) target = $region56
      $region55: #{l1out_forward.3} parent=31 // pred_region
        %p414 = scmp.lt.s32.totalorder %s18, 0
        %s415 = scalar_select %p414, %s18, 0
        %s416 = scalar_lea.vmem %s3, %s415
      $region56: #{l1out_forward.3} parent=31 // pred_fallthru
        _
    $region32: #{l1out_forward.3} parent=5 // pred_fallthru
      _
    %p417 = scmp.le.s32.totalorder 2, %s9
    // Predicated region
    $region57: #{l1out_forward.3} parent=5 // pred_check
      %p418 = pneg %p417
    $region58: #{l1out_forward.3} parent=5 // pred_check_branch
      %420 = sbr.rel (%p418) target = $region60
    $region59: #{l1out_forward.3} parent=5 // pred_region
      %s421 = ssub.s32 %s9, 2
    $region60: #{l1out_forward.3} parent=5 // pred_fallthru
      _
  $region6: #{l1out_forward.3} parent=0 // loop_footer
    %s13 = sadd.s32 1, %s9
  $region7: #{l1out_forward.3} parent=0 // loop_footer_branch
    %8 = sbr.rel target = $region3
  $region8: #{l1out_forward.3} parent=0 // loop_exit
    _

// kernel: l1out_forward.2
$region0: #{l1out_forward.2}
  #allocation0 [shape = 'u32[]', space=smem, size = 0x4, offset = 0x4, fixed_abs, tag = 'smem constant byte address 0x4 - core index']
  #allocation1 [shape = 'u32[144,128]{1,0:T(1,128)}', space=vmem, size = 0x12000, scoped, tag = 'internal scratch']
  %s0 = inlined_call_operand.vmem [shape: f32[16,10], index: 0, kind: input, shape index: {}]
  %s1 = inlined_call_operand.vmem [shape: f32[16,8], index: 1, kind: input, shape index: {}]
  %s2 = inlined_call_operand.vmem [shape: f32[10,16], index: 2, kind: input, shape index: {}]
  %s3 = inlined_call_operand.vmem [shape: f32[1,16], index: 3, kind: input, shape index: {}]
  %s4 = inlined_call_operand.vmem [shape: f32[16,8], index: 4, kind: input, shape index: {}]
  %s5 = inlined_call_operand.vmem [shape: f32[1,8], index: 5, kind: input, shape index: {}]
  %s6 = inlined_call_operand.vmem [shape: f32[10,16], index: 6, kind: input, shape index: {}]
  %s7 = inlined_call_operand.vmem [shape: f32[1,16], index: 7, kind: input, shape index: {}]
  %s8 = inlined_call_operand.vmem [shape: f32[16,8], index: 8, kind: input, shape index: {}]
  %s9 = inlined_call_operand.vmem [shape: f32[1,8], index: 9, kind: input, shape index: {}]
  %s10 = inlined_call_operand.vmem [shape: f32[16,8], index: 10, kind: output, shape index: {0}]
  %s11 = inlined_call_operand.vmem [shape: f32[16,8], index: 11, kind: output, shape index: {1}]
  %s12 = inlined_call_operand.vmem [shape: f32[16,1], index: 12, kind: output, shape index: {2}]
  %s13 = inlined_call_operand.vmem [shape: f32[16,1], index: 13, kind: output, shape index: {3}]
  %14 = xla_tuple %s10, %s11, %s12, %s13
  %s15 = sld [smem:[#allocation0]]
  $region74: #{l1out_forward.2} parent=0
    _
  %s17 = ssub.s32 1, %s15
  %s18 = scalar_select 0, %s17, %s15
  // Predicated region
  $region2: #{l1out_forward.2} parent=0 // pred_check
    _
  $region3: #{l1out_forward.2} parent=0 // pred_check_branch
    %20 = sbr.rel (0) target = $region5
  $region4: #{l1out_forward.2} parent=0 // pred_region
    _
  $region5: #{l1out_forward.2} parent=0 // pred_fallthru
    _
  // Predicated region
  $region6: #{l1out_forward.2} parent=0 // pred_check
    _
  $region7: #{l1out_forward.2} parent=0 // pred_check_branch
    %22 = sbr.rel (0) target = $region9
  $region8: #{l1out_forward.2} parent=0 // pred_region
    _
  $region9: #{l1out_forward.2} parent=0 // pred_fallthru
    _
  // Predicated region
  $region10: #{l1out_forward.2} parent=0 // pred_check
    _
  $region11: #{l1out_forward.2} parent=0 // pred_check_branch
    %24 = sbr.rel (0) target = $region13
  $region12: #{l1out_forward.2} parent=0 // pred_region
    _
  $region13: #{l1out_forward.2} parent=0 // pred_fallthru
    _
  // Predicated region
  $region14: #{l1out_forward.2} parent=0 // pred_check
    _
  $region15: #{l1out_forward.2} parent=0 // pred_check_branch
    %26 = sbr.rel (0) target = $region17
  $region16: #{l1out_forward.2} parent=0 // pred_region
    _
  $region17: #{l1out_forward.2} parent=0 // pred_fallthru
    _
  // Predicated region
  $region18: #{l1out_forward.2} parent=0 // pred_check
    _
  $region19: #{l1out_forward.2} parent=0 // pred_check_branch
    %28 = sbr.rel (0) target = $region21
  $region20: #{l1out_forward.2} parent=0 // pred_region
    _
  $region21: #{l1out_forward.2} parent=0 // pred_fallthru
    _
  // Predicated region
  $region22: #{l1out_forward.2} parent=0 // pred_check
    _
  $region23: #{l1out_forward.2} parent=0 // pred_check_branch
    %30 = sbr.rel (0) target = $region25
  $region24: #{l1out_forward.2} parent=0 // pred_region
    _
  $region25: #{l1out_forward.2} parent=0 // pred_fallthru
    _
  // Predicated region
  $region26: #{l1out_forward.2} parent=0 // pred_check
    _
  $region27: #{l1out_forward.2} parent=0 // pred_check_branch
    %32 = sbr.rel (0) target = $region29
  $region28: #{l1out_forward.2} parent=0 // pred_region
    _
  $region29: #{l1out_forward.2} parent=0 // pred_fallthru
    _
  // Predicated region
  $region30: #{l1out_forward.2} parent=0 // pred_check
    _
  $region31: #{l1out_forward.2} parent=0 // pred_check_branch
    %34 = sbr.rel (0) target = $region33
  $region32: #{l1out_forward.2} parent=0 // pred_region
    _
  $region33: #{l1out_forward.2} parent=0 // pred_fallthru
    _
  // Predicated region
  $region34: #{l1out_forward.2} parent=0 // pred_check
    _
  $region35: #{l1out_forward.2} parent=0 // pred_check_branch
    %36 = sbr.rel (0) target = $region37
  $region36: #{l1out_forward.2} parent=0 // pred_region
    _
  $region37: #{l1out_forward.2} parent=0 // pred_fallthru
    _
  // Predicated region
  $region38: #{l1out_forward.2} parent=0 // pred_check
    _
  $region39: #{l1out_forward.2} parent=0 // pred_check_branch
    %38 = sbr.rel (0) target = $region41
  $region40: #{l1out_forward.2} parent=0 // pred_region
    _
  $region41: #{l1out_forward.2} parent=0 // pred_fallthru
    _
  %v39 = vld [vmem:[%s0] sm:$0xff]
  %v40 = vld [vmem:[%s0 + $0x8] sm:$0xff]
  %v41 = vld [vmem:[%s1] sm:$0xff]
  %v42 = vld [vmem:[%s1 + $0x8] sm:$0xff]
  %v43 = vld [vmem:[%s2] sm:$0xff]
  %v44 = vld [vmem:[%s2 + $0x8] sm:$0x3]
  %v45 = vld [vmem:[%s3] sm:$0x1]
  %v47 = vlaneseq
  %v48 = vshrl.u32 %v47, 7
  %v49 = vsub.s32 0, %v48
  %v50 = vrot.slane %v45, %v49
  %vm52 = vcmask 80896
  %v54 = vsel %vm52, %v39, 0
  %v57 = vsel %vm52, %v40, 0
  %vm59 = vcmask 1041408
  %v61 = vsel %vm59, %v44, 0
  %63 = vmatprep.subr.mxu0 0.0
  %64 = vmatpush1.msra.mxu0 %v43
  %65 = vmatprep.subr.mxu0 0.0
  %66 = vmatpush1.msra.mxu0 %v61
  %67 = vmatprep.subr.mxu0 0.0
  %68 = vmatpush1.msra.mxu0 0.0
  %69 = vmatprep.subr.mxu0 0.0
  %70 = vmatpush1.msra.mxu0 0.0
  %71 = vmatprep.subr.mxu0 0.0
  %72 = vmatpush1.msra.mxu0 0.0
  %73 = vmatprep.subr.mxu0 0.0
  %74 = vmatpush1.msra.mxu0 0.0
  %75 = vmatprep.subr.mxu0 0.0
  %76 = vmatpush1.msra.mxu0 0.0
  %77 = vmatprep.subr.mxu0 0.0
  %78 = vmatpush1.msra.mxu0 0.0
  %79 = vmatprep.subr.mxu0 0.0
  %80 = vmatpush1.msra.mxu0 0.0
  %81 = vmatprep.subr.mxu0 0.0
  %82 = vmatpush1.msra.mxu0 0.0
  %83 = vmatprep.subr.mxu0 0.0
  %84 = vmatpush1.msra.mxu0 0.0
  %85 = vmatprep.subr.mxu0 0.0
  %86 = vmatpush1.msra.mxu0 0.0
  %87 = vmatprep.subr.mxu0 0.0
  %88 = vmatpush1.msra.mxu0 0.0
  %89 = vmatprep.subr.mxu0 0.0
  %90 = vmatpush1.msra.mxu0 0.0
  %91 = vmatprep.subr.mxu0 0.0
  %92 = vmatpush1.msra.mxu0 0.0
  %93 = vmatprep.subr.mxu0 0.0
  %94 = vmatpush1.msra.mxu0 0.0
  %95 = vmatprep.subr.mxu0 0.0
  %96 = vmatpush1.msra.mxu0 0.0
  %97 = vmatprep.subr.mxu0 0.0
  %98 = vmatpush1.msra.mxu0 0.0
  %99 = vmatprep.subr.mxu0 0.0
  %100 = vmatpush1.msra.mxu0 0.0
  %101 = vmatprep.subr.mxu0 0.0
  %102 = vmatpush1.msra.mxu0 0.0
  %103 = vmatprep.subr.mxu0 0.0
  %104 = vmatpush1.msra.mxu0 0.0
  %105 = vmatprep.subr.mxu0 0.0
  %106 = vmatpush1.msra.mxu0 0.0
  %107 = vmatprep.subr.mxu0 0.0
  %108 = vmatpush1.msra.mxu0 0.0
  %109 = vmatprep.subr.mxu0 0.0
  %110 = vmatpush1.msra.mxu0 0.0
  %111 = vmatprep.subr.mxu0 0.0
  %112 = vmatpush1.msra.mxu0 0.0
  %113 = vmatprep.subr.mxu0 0.0
  %114 = vmatpush1.msra.mxu0 0.0
  %115 = vmatprep.subr.mxu0 0.0
  %116 = vmatpush1.msra.mxu0 0.0
  %117 = vmatprep.subr.mxu0 0.0
  %118 = vmatpush1.msra.mxu0 0.0
  %119 = vmatprep.subr.mxu0 0.0
  %120 = vmatpush1.msra.mxu0 0.0
  %121 = vmatprep.subr.mxu0 0.0
  %122 = vmatpush1.msra.mxu0 0.0
  %123 = vmatprep.subr.mxu0 0.0
  %124 = vmatpush1.msra.mxu0 0.0
  %125 = vmatprep.subr.mxu0 0.0
  %126 = vmatpush1.msra.mxu0 0.0
  %127 = vmatprep.mubr.f32.mxu0 0.0
  %128 = vmatmul.mubr.f32.gmra.mrb[0].mxu0 %v54
  %v129 = vpop.f32.mrb[0].mxu0
  %v130 = vadd.f32 %v50, %v129
  %v131 = vpop.f32.mrb[0].mxu0
  %132 = vmatprep.mubr.f32.mxu0 0.0
  %133 = vmatmul.mubr.f32.gmra.mrb[0].mxu0 %v57
  %v134 = vpop.f32.mrb[0].mxu0
  %v135 = vadd.f32 %v50, %v134
  %v136 = vpop.f32.mrb[0].mxu0
  %137 = vdwg.mxu0
  %v138 = vmax.f32 %v130, 0.0
  %v139 = vmax.f32 %v135, 0.0
  %v140 = vld [vmem:[%s4] sm:$0xff]
  %v141 = vld [vmem:[%s4 + $0x8] sm:$0xff]
  %v142 = vld [vmem:[%s5] sm:$0x1]
  %v144 = vlaneseq
  %v145 = vshrl.u32 %v144, 7
  %v146 = vsub.s32 0, %v145
  %v147 = vrot.slane %v142, %v146
  %vm149 = vcmask 130048
  %v151 = vsel %vm149, %v138, 0
  %v154 = vsel %vm149, %v139, 0
  %156 = vmatprep.subr.mxu0 0.0
  %157 = vmatpush1.msra.mxu0 %v140
  %158 = vmatprep.subr.mxu0 0.0
  %159 = vmatpush1.msra.mxu0 %v141
  %160 = vmatprep.subr.mxu0 0.0
  %161 = vmatpush1.msra.mxu0 0.0
  %162 = vmatprep.subr.mxu0 0.0
  %163 = vmatpush1.msra.mxu0 0.0
  %164 = vmatprep.subr.mxu0 0.0
  %165 = vmatpush1.msra.mxu0 0.0
  %166 = vmatprep.subr.mxu0 0.0
  %167 = vmatpush1.msra.mxu0 0.0
  %168 = vmatprep.subr.mxu0 0.0
  %169 = vmatpush1.msra.mxu0 0.0
  %170 = vmatprep.subr.mxu0 0.0
  %171 = vmatpush1.msra.mxu0 0.0
  %172 = vmatprep.subr.mxu0 0.0
  %173 = vmatpush1.msra.mxu0 0.0
  %174 = vmatprep.subr.mxu0 0.0
  %175 = vmatpush1.msra.mxu0 0.0
  %176 = vmatprep.subr.mxu0 0.0
  %177 = vmatpush1.msra.mxu0 0.0
  %178 = vmatprep.subr.mxu0 0.0
  %179 = vmatpush1.msra.mxu0 0.0
  %180 = vmatprep.subr.mxu0 0.0
  %181 = vmatpush1.msra.mxu0 0.0
  %182 = vmatprep.subr.mxu0 0.0
  %183 = vmatpush1.msra.mxu0 0.0
  %184 = vmatprep.subr.mxu0 0.0
  %185 = vmatpush1.msra.mxu0 0.0
  %186 = vmatprep.subr.mxu0 0.0
  %187 = vmatpush1.msra.mxu0 0.0
  %188 = vmatprep.subr.mxu0 0.0
  %189 = vmatpush1.msra.mxu0 0.0
  %190 = vmatprep.subr.mxu0 0.0
  %191 = vmatpush1.msra.mxu0 0.0
  %192 = vmatprep.subr.mxu0 0.0
  %193 = vmatpush1.msra.mxu0 0.0
  %194 = vmatprep.subr.mxu0 0.0
  %195 = vmatpush1.msra.mxu0 0.0
  %196 = vmatprep.subr.mxu0 0.0
  %197 = vmatpush1.msra.mxu0 0.0
  %198 = vmatprep.subr.mxu0 0.0
  %199 = vmatpush1.msra.mxu0 0.0
  %200 = vmatprep.subr.mxu0 0.0
  %201 = vmatpush1.msra.mxu0 0.0
  %202 = vmatprep.subr.mxu0 0.0
  %203 = vmatpush1.msra.mxu0 0.0
  %204 = vmatprep.subr.mxu0 0.0
  %205 = vmatpush1.msra.mxu0 0.0
  %206 = vmatprep.subr.mxu0 0.0
  %207 = vmatpush1.msra.mxu0 0.0
  %208 = vmatprep.subr.mxu0 0.0
  %209 = vmatpush1.msra.mxu0 0.0
  %210 = vmatprep.subr.mxu0 0.0
  %211 = vmatpush1.msra.mxu0 0.0
  %212 = vmatprep.subr.mxu0 0.0
  %213 = vmatpush1.msra.mxu0 0.0
  %214 = vmatprep.subr.mxu0 0.0
  %215 = vmatpush1.msra.mxu0 0.0
  %216 = vmatprep.subr.mxu0 0.0
  %217 = vmatpush1.msra.mxu0 0.0
  %218 = vmatprep.subr.mxu0 0.0
  %219 = vmatpush1.msra.mxu0 0.0
  %220 = vmatprep.mubr.f32.mxu0 0.0
  %221 = vmatmul.mubr.f32.gmra.mrb[0].mxu0 %v151
  %v222 = vpop.f32.mrb[0].mxu0
  %v223 = vadd.f32 %v147, %v222
  %v224 = vpop.f32.mrb[0].mxu0
  %225 = vmatprep.mubr.f32.mxu0 0.0
  %226 = vmatmul.mubr.f32.gmra.mrb[0].mxu0 %v154
  %v227 = vpop.f32.mrb[0].mxu0
  %v228 = vadd.f32 %v147, %v227
  %v229 = vpop.f32.mrb[0].mxu0
  %230 = vdwg.mxu0
  %v231 = vld [vmem:[%s6] sm:$0xff]
  %v232 = vld [vmem:[%s6 + $0x8] sm:$0x3]
  %v233 = vld [vmem:[%s7] sm:$0x1]
  %v235 = vlaneseq
  %v236 = vshrl.u32 %v235, 7
  %v237 = vsub.s32 0, %v236
  %v238 = vrot.slane %v233, %v237
  %v241 = vsel %vm59, %v232, 0
  %243 = vmatprep.subr.mxu0 0.0
  %244 = vmatpush1.msra.mxu0 %v231
  %245 = vmatprep.subr.mxu0 0.0
  %246 = vmatpush1.msra.mxu0 %v241
  %247 = vmatprep.subr.mxu0 0.0
  %248 = vmatpush1.msra.mxu0 0.0
  %249 = vmatprep.subr.mxu0 0.0
  %250 = vmatpush1.msra.mxu0 0.0
  %251 = vmatprep.subr.mxu0 0.0
  %252 = vmatpush1.msra.mxu0 0.0
  %253 = vmatprep.subr.mxu0 0.0
  %254 = vmatpush1.msra.mxu0 0.0
  %255 = vmatprep.subr.mxu0 0.0
  %256 = vmatpush1.msra.mxu0 0.0
  %257 = vmatprep.subr.mxu0 0.0
  %258 = vmatpush1.msra.mxu0 0.0
  %259 = vmatprep.subr.mxu0 0.0
  %260 = vmatpush1.msra.mxu0 0.0
  %261 = vmatprep.subr.mxu0 0.0
  %262 = vmatpush1.msra.mxu0 0.0
  %263 = vmatprep.subr.mxu0 0.0
  %264 = vmatpush1.msra.mxu0 0.0
  %265 = vmatprep.subr.mxu0 0.0
  %266 = vmatpush1.msra.mxu0 0.0
  %267 = vmatprep.subr.mxu0 0.0
  %268 = vmatpush1.msra.mxu0 0.0
  %269 = vmatprep.subr.mxu0 0.0
  %270 = vmatpush1.msra.mxu0 0.0
  %271 = vmatprep.subr.mxu0 0.0
  %272 = vmatpush1.msra.mxu0 0.0
  %273 = vmatprep.subr.mxu0 0.0
  %274 = vmatpush1.msra.mxu0 0.0
  %275 = vmatprep.subr.mxu0 0.0
  %276 = vmatpush1.msra.mxu0 0.0
  %277 = vmatprep.subr.mxu0 0.0
  %278 = vmatpush1.msra.mxu0 0.0
  %279 = vmatprep.subr.mxu0 0.0
  %280 = vmatpush1.msra.mxu0 0.0
  %281 = vmatprep.subr.mxu0 0.0
  %282 = vmatpush1.msra.mxu0 0.0
  %283 = vmatprep.subr.mxu0 0.0
  %284 = vmatpush1.msra.mxu0 0.0
  %285 = vmatprep.subr.mxu0 0.0
  %286 = vmatpush1.msra.mxu0 0.0
  %287 = vmatprep.subr.mxu0 0.0
  %288 = vmatpush1.msra.mxu0 0.0
  %289 = vmatprep.subr.mxu0 0.0
  %290 = vmatpush1.msra.mxu0 0.0
  %291 = vmatprep.subr.mxu0 0.0
  %292 = vmatpush1.msra.mxu0 0.0
  %293 = vmatprep.subr.mxu0 0.0
  %294 = vmatpush1.msra.mxu0 0.0
  %295 = vmatprep.subr.mxu0 0.0
  %296 = vmatpush1.msra.mxu0 0.0
  %297 = vmatprep.subr.mxu0 0.0
  %298 = vmatpush1.msra.mxu0 0.0
  %299 = vmatprep.subr.mxu0 0.0
  %300 = vmatpush1.msra.mxu0 0.0
  %301 = vmatprep.subr.mxu0 0.0
  %302 = vmatpush1.msra.mxu0 0.0
  %303 = vmatprep.subr.mxu0 0.0
  %304 = vmatpush1.msra.mxu0 0.0
  %305 = vmatprep.subr.mxu0 0.0
  %306 = vmatpush1.msra.mxu0 0.0
  %307 = vmatprep.mubr.f32.mxu0 0.0
  %308 = vmatmul.mubr.f32.gmra.mrb[0].mxu0 %v54
  %v309 = vpop.f32.mrb[0].mxu0
  %v310 = vadd.f32 %v238, %v309
  %v311 = vpop.f32.mrb[0].mxu0
  %312 = vmatprep.mubr.f32.mxu0 0.0
  %313 = vmatmul.mubr.f32.gmra.mrb[0].mxu0 %v57
  %v314 = vpop.f32.mrb[0].mxu0
  %v315 = vadd.f32 %v238, %v314
  %v316 = vpop.f32.mrb[0].mxu0
  %317 = vdwg.mxu0
  %v318 = vmax.f32 %v310, 0.0
  %v319 = vmax.f32 %v315, 0.0
  %v320 = vld [vmem:[%s8] sm:$0xff]
  %v321 = vld [vmem:[%s8 + $0x8] sm:$0xff]
  %v322 = vld [vmem:[%s9] sm:$0x1]
  %v324 = vlaneseq
  %v325 = vshrl.u32 %v324, 7
  %v326 = vsub.s32 0, %v325
  %v327 = vrot.slane %v322, %v326
  %v330 = vsel %vm149, %v318, 0
  %v333 = vsel %vm149, %v319, 0
  %335 = vmatprep.subr.mxu0 0.0
  %336 = vmatpush1.msra.mxu0 %v320
  %337 = vmatprep.subr.mxu0 0.0
  %338 = vmatpush1.msra.mxu0 %v321
  %339 = vmatprep.subr.mxu0 0.0
  %340 = vmatpush1.msra.mxu0 0.0
  %341 = vmatprep.subr.mxu0 0.0
  %342 = vmatpush1.msra.mxu0 0.0
  %343 = vmatprep.subr.mxu0 0.0
  %344 = vmatpush1.msra.mxu0 0.0
  %345 = vmatprep.subr.mxu0 0.0
  %346 = vmatpush1.msra.mxu0 0.0
  %347 = vmatprep.subr.mxu0 0.0
  %348 = vmatpush1.msra.mxu0 0.0
  %349 = vmatprep.subr.mxu0 0.0
  %350 = vmatpush1.msra.mxu0 0.0
  %351 = vmatprep.subr.mxu0 0.0
  %352 = vmatpush1.msra.mxu0 0.0
  %353 = vmatprep.subr.mxu0 0.0
  %354 = vmatpush1.msra.mxu0 0.0
  %355 = vmatprep.subr.mxu0 0.0
  %356 = vmatpush1.msra.mxu0 0.0
  %357 = vmatprep.subr.mxu0 0.0
  %358 = vmatpush1.msra.mxu0 0.0
  %359 = vmatprep.subr.mxu0 0.0
  %360 = vmatpush1.msra.mxu0 0.0
  %361 = vmatprep.subr.mxu0 0.0
  %362 = vmatpush1.msra.mxu0 0.0
  %363 = vmatprep.subr.mxu0 0.0
  %364 = vmatpush1.msra.mxu0 0.0
  %365 = vmatprep.subr.mxu0 0.0
  %366 = vmatpush1.msra.mxu0 0.0
  %367 = vmatprep.subr.mxu0 0.0
  %368 = vmatpush1.msra.mxu0 0.0
  %369 = vmatprep.subr.mxu0 0.0
  %370 = vmatpush1.msra.mxu0 0.0
  %371 = vmatprep.subr.mxu0 0.0
  %372 = vmatpush1.msra.mxu0 0.0
  %373 = vmatprep.subr.mxu0 0.0
  %374 = vmatpush1.msra.mxu0 0.0
  %375 = vmatprep.subr.mxu0 0.0
  %376 = vmatpush1.msra.mxu0 0.0
  %377 = vmatprep.subr.mxu0 0.0
  %378 = vmatpush1.msra.mxu0 0.0
  %379 = vmatprep.subr.mxu0 0.0
  %380 = vmatpush1.msra.mxu0 0.0
  %381 = vmatprep.subr.mxu0 0.0
  %382 = vmatpush1.msra.mxu0 0.0
  %383 = vmatprep.subr.mxu0 0.0
  %384 = vmatpush1.msra.mxu0 0.0
  %385 = vmatprep.subr.mxu0 0.0
  %386 = vmatpush1.msra.mxu0 0.0
  %387 = vmatprep.subr.mxu0 0.0
  %388 = vmatpush1.msra.mxu0 0.0
  %389 = vmatprep.subr.mxu0 0.0
  %390 = vmatpush1.msra.mxu0 0.0
  %391 = vmatprep.subr.mxu0 0.0
  %392 = vmatpush1.msra.mxu0 0.0
  %393 = vmatprep.subr.mxu0 0.0
  %394 = vmatpush1.msra.mxu0 0.0
  %395 = vmatprep.subr.mxu0 0.0
  %396 = vmatpush1.msra.mxu0 0.0
  %397 = vmatprep.subr.mxu0 0.0
  %398 = vmatpush1.msra.mxu0 0.0
  %399 = vmatprep.mubr.f32.mxu0 0.0
  %400 = vmatmul.mubr.f32.gmra.mrb[0].mxu0 %v330
  %v401 = vpop.f32.mrb[0].mxu0
  %v402 = vadd.f32 %v327, %v401
  %v403 = vpop.f32.mrb[0].mxu0
  %404 = vmatprep.mubr.f32.mxu0 0.0
  %405 = vmatmul.mubr.f32.gmra.mrb[0].mxu0 %v333
  %v406 = vpop.f32.mrb[0].mxu0
  %v407 = vadd.f32 %v327, %v406
  %v408 = vpop.f32.mrb[0].mxu0
  %409 = vdwg.mxu0
  %v410 = vtanh.pop %v402
  %v411 = vtanh.pop %v407
  %v412 = vsub.f32 0.0, %v410
  %v413 = vsub.f32 0.0, %v411
  %v414 = vmul.f32 %v412, 1.442695
  %v415 = vpow.pop %v414
  %v416 = vmul.f32 %v413, 1.442695
  %v417 = vpow.pop %v416
  %v418 = vmul.f32 %v223, %v415
  %v419 = vmul.f32 %v228, %v417
  %vm420 = vcmask 64512
  %421 = vst.msk [vmem:[%s10] sm:$0xff] %vm420, %v418
  %422 = vst.msk [vmem:[%s10 + $0x8] sm:$0xff] %vm420, %v419
  %v423 = vmul.f32 %v415, -0.5
  %v424 = vmul.f32 %v417, -0.5
  %425 = vst.msk [vmem:[%s11] sm:$0xff] %vm420, %v423
  %426 = vst.msk [vmem:[%s11 + $0x8] sm:$0xff] %vm420, %v424
  %v427 = vsel %vm420, %v410, 0.0
  %428 = vadd.xlane.f32.xlu0 %v427
  %v429 = vpop.xlane.xlu0 %428
  %v430 = vsel %vm420, %v411, 0.0
  %431 = vadd.xlane.f32.xlu0 %v430
  %v432 = vpop.xlane.xlu0 %431
  %v433 = vmul.f32 %v223, %v418
  %v434 = vmul.f32 %v228, %v419
  %v435 = vsel %vm420, %v433, 0.0
  %436 = vadd.xlane.f32.xlu0 %v435
  %v437 = vpop.xlane.xlu0 %436
  %v438 = vsel %vm420, %v434, 0.0
  %439 = vadd.xlane.f32.xlu0 %v438
  %v440 = vpop.xlane.xlu0 %439
  %v441 = vadd.f32 %v429, %v437
  %v442 = vadd.f32 %v432, %v440
  %v443 = vmul.f32 %v441, -0.5
  %v444 = vmul.f32 %v442, -0.5
  %vm445 = vcmask 7168
  %446 = vst.msk [vmem:[%s12] sm:$0xff] %vm445, %v443
  %447 = vst.msk [vmem:[%s12 + $0x8] sm:$0xff] %vm445, %v444
  %v448 = vsub.f32 %v223, %v41
  %v449 = vsub.f32 %v228, %v42
  %v450 = vmul.f32 %v448, %v448
  %v451 = vmul.f32 %v449, %v449
  %v452 = vmul.f32 %v450, -0.5
  %v453 = vmul.f32 %v451, -0.5
  %v454 = vmul.f32 %v452, %v415
  %v455 = vmul.f32 %v453, %v417
  %v456 = vmul.f32 %v410, 0.5
  %v457 = vmul.f32 %v411, 0.5
  %v458 = vsub.f32 %v454, %v456
  %v459 = vsub.f32 %v455, %v457
  %v460 = vsel %vm420, %v458, 0.0
  %461 = vadd.xlane.f32.xlu0 %v460
  %v462 = vpop.xlane.xlu0 %461
  %v463 = vsel %vm420, %v459, 0.0
  %464 = vadd.xlane.f32.xlu0 %v463
  %v465 = vpop.xlane.xlu0 %464
  %466 = vst.msk [vmem:[%s13] sm:$0xff] %vm445, %v462
  %467 = vst.msk [vmem:[%s13 + $0x8] sm:$0xff] %vm445, %v465
  // Predicated region
  $region42: #{l1out_forward.2} parent=0 // pred_check
    _
  $region43: #{l1out_forward.2} parent=0 // pred_check_branch
    %469 = sbr.rel (0) target = $region45
  $region44: #{l1out_forward.2} parent=0 // pred_region
    _
  $region45: #{l1out_forward.2} parent=0 // pred_fallthru
    _
  // Predicated region
  $region46: #{l1out_forward.2} parent=0 // pred_check
    _
  $region47: #{l1out_forward.2} parent=0 // pred_check_branch
    %471 = sbr.rel (0) target = $region49
  $region48: #{l1out_forward.2} parent=0 // pred_region
    _
  $region49: #{l1out_forward.2} parent=0 // pred_fallthru
    _
  // Predicated region
  $region50: #{l1out_forward.2} parent=0 // pred_check
    _
  $region51: #{l1out_forward.2} parent=0 // pred_check_branch
    %473 = sbr.rel (0) target = $region53
  $region52: #{l1out_forward.2} parent=0 // pred_region
    _
  $region53: #{l1out_forward.2} parent=0 // pred_fallthru
    _
  // Predicated region
  $region54: #{l1out_forward.2} parent=0 // pred_check
    _
  $region55: #{l1out_forward.2} parent=0 // pred_check_branch
    %475 = sbr.rel (0) target = $region57
  $region56: #{l1out_forward.2} parent=0 // pred_region
    _
  $region57: #{l1out_forward.2} parent=0 // pred_fallthru
    _
  // Predicated region
  $region58: #{l1out_forward.2} parent=0 // pred_check
    _
  $region59: #{l1out_forward.2} parent=0 // pred_check_branch
    %477 = sbr.rel (0) target = $region61
  $region60: #{l1out_forward.2} parent=0 // pred_region
    _
  $region61: #{l1out_forward.2} parent=0 // pred_fallthru
    _
  // Predicated region
  $region62: #{l1out_forward.2} parent=0 // pred_check
    _
  $region63: #{l1out_forward.2} parent=0 // pred_check_branch
    %479 = sbr.rel (0) target = $region65
  $region64: #{l1out_forward.2} parent=0 // pred_region
    _
  $region65: #{l1out_forward.2} parent=0 // pred_fallthru
    _
  // Predicated region
  $region66: #{l1out_forward.2} parent=0 // pred_check
    _
  $region67: #{l1out_forward.2} parent=0 // pred_check_branch
    %481 = sbr.rel (0) target = $region69
  $region68: #{l1out_forward.2} parent=0 // pred_region
    _
  $region69: #{l1out_forward.2} parent=0 // pred_fallthru
    _
  // Predicated region
  $region70: #{l1out_forward.2} parent=0 // pred_check
    _
  $region71: #{l1out_forward.2} parent=0 // pred_check_branch
    %483 = sbr.rel (0) target = $region73
  $region72: #{l1out_forward.2} parent=0 // pred_region
    _
  $region73: #{l1out_forward.2} parent=0 // pred_fallthru
    _

</llo_original>
